<compile_context>
chip_gen: v7x
topology: tpu7x:2x2x1
jax: 0.10.0
libtpu: 0.0.40
codegen_flags: <defaults>
</compile_context>

<pallas_src>
import math
from functools import partial

import jax
import jax.numpy as jnp
from jax import lax
from jax.experimental import pallas as pl
from jax.experimental.pallas import tpu as pltpu

LANE = 128


# ------------------------------ fused kernel -------------------------------- #

def _fused_kernel(x_ref, wqkv_ref, bqkv_ref, wot_ref, bo_ref, o_ref, hcat_ref,
                  *, num_heads, d_pad):
    """Whole batch, all heads: gather+QKV -> attention -> W_o, fully fused.

    x_ref    : (B, S, d_model)  f32
    wqkv_ref : (d_model, 3*H*d_pad)  bf16   [Q_h0..Q_hH | K_h0.. | V_h0..], lane aligned
    bqkv_ref : (1, 3*H*d_pad)  f32
    wot_ref  : (H*d_pad, dm_pad)  bf16      W_o pre-transposed, zero padded
    bo_ref   : (1, dm_pad)  f32
    o_ref    : (B, S, dm_pad)  f32
    hcat_ref : (B*S, H*d_pad)  bf16 scratch (concatenated head outputs)
    """
    B, S, d_model = x_ref.shape
    H = num_heads
    dm_pad = wot_ref.shape[1]

    # Single lane-wide QKV projection for all heads (gather + 1/sqrt(d_h) scale
    # already folded into the weights).  bf16 MXU operands, f32 accumulation.
    x2 = x_ref[...].reshape(B * S, d_model).astype(jnp.bfloat16)
    qkv = jnp.dot(x2, wqkv_ref[...], preferred_element_type=jnp.float32)
    qkv = (qkv + bqkv_ref[...]).reshape(B, S, 3 * H * d_pad)

    for h in range(H):                       # static loop; lane-aligned free slices
        q = qkv[:, :, h * d_pad:(h + 1) * d_pad].astype(jnp.bfloat16)
        k = qkv[:, :, (H + h) * d_pad:(H + h + 1) * d_pad].astype(jnp.bfloat16)
        v = qkv[:, :, (2 * H + h) * d_pad:(2 * H + h + 1) * d_pad].astype(jnp.bfloat16)

        # scores (B, S, S); scale is already in Wq/bq.  Batched over B.
        s = lax.dot_general(q, k, (((2,), (2,)), ((0,), (0,))),
                            preferred_element_type=jnp.float32)

        # softmax over keys, strictly in f32, exact division.
        s = s - jnp.max(s, axis=-1, keepdims=True)
        e = jnp.exp(s)
        p = e / jnp.sum(e, axis=-1, keepdims=True)

        pv = lax.dot_general(p.astype(jnp.bfloat16), v,
                             (((2,), (1,)), ((0,), (0,))),
                             preferred_element_type=jnp.float32)      # (B, S, d_pad)

        hcat_ref[:, h * d_pad:(h + 1) * d_pad] = (
            pv.reshape(B * S, d_pad).astype(hcat_ref.dtype))

    # One output matmul against the zero-padded W_o^T (no concat, no acc adds).
    out = jnp.dot(hcat_ref[...], wot_ref[...],
                  preferred_element_type=jnp.float32) + bo_ref[...]
    o_ref[...] = out.reshape(B, S, dm_pad).astype(o_ref.dtype)


# -------------------------- host-side weight fusion ------------------------- #

def build_fused_params(params, head_dims, d_model):
    """Fold the per-head feature gather + 1/sqrt(d_h) scale into lane-padded QKV
    weights; pre-transpose and zero-pad W_o.  Call ONCE at init time (host side),
    not in the per-forward path."""
    H = len(head_dims)
    max_h = max(len(d) for d in head_dims)
    d_pad = ((max_h + LANE - 1) // LANE) * LANE      # per-head lane-aligned width
    dm_pad = ((d_model + LANE - 1) // LANE) * LANE   # lane-dense output width

    wqkv = jnp.zeros((d_model, 3 * H * d_pad), jnp.float32)
    bqkv = jnp.zeros((3 * H * d_pad,), jnp.float32)
    wot = jnp.zeros((H * d_pad, dm_pad), jnp.float32)

    col = 0
    for h, dims in enumerate(head_dims):
        d_h = len(dims)
        assert 0 <= min(dims) and max(dims) < d_model, head_dims
        idx = jnp.asarray(dims, jnp.int32)
        p = params["heads"][h]
        scale = 1.0 / math.sqrt(d_h)

        def scatter(w):
            # (d_model, d_h) such that x @ scatter(w) == x[:, dims] @ w.T
            # (.add, not .set, so duplicate indices within a head stay exact).
            return jnp.zeros((d_model, w.shape[0]), w.dtype).at[idx].add(w.T)

        wqkv = wqkv.at[:, h * d_pad:h * d_pad + d_h].set(scatter(p["wq"]) * scale)
        wqkv = wqkv.at[:, (H + h) * d_pad:(H + h) * d_pad + d_h].set(scatter(p["wk"]))
        wqkv = wqkv.at[:, (2 * H + h) * d_pad:(2 * H + h) * d_pad + d_h].set(scatter(p["wv"]))
        bqkv = bqkv.at[h * d_pad:h * d_pad + d_h].set(p["bq"] * scale)
        bqkv = bqkv.at[(H + h) * d_pad:(H + h) * d_pad + d_h].set(p["bk"])
        bqkv = bqkv.at[(2 * H + h) * d_pad:(2 * H + h) * d_pad + d_h].set(p["bv"])

        # W_o columns for this head -> rows [h*d_pad, h*d_pad+d_h) of W_o^T.
        wot = wot.at[h * d_pad:h * d_pad + d_h, :d_model].set(
            params["wo"][:, col:col + d_h].T)
        col += d_h

    bo = jnp.zeros((dm_pad,), jnp.float32).at[:d_model].set(params["bo"])
    return (wqkv.astype(jnp.bfloat16), bqkv.reshape(1, -1),
            wot.astype(jnp.bfloat16), bo.reshape(1, -1), H, d_pad)


# --------------------------------- wrapper ---------------------------------- #

@partial(jax.jit, static_argnames=("num_heads", "d_pad"))
def associated_attention(x, wqkv, bqkv, wot, bo, *, num_heads, d_pad):
    """Forward pass equivalent to AssociatedAttention.forward (one pallas_call)."""
    assert x.ndim == 3
    B, S, d_model = x.shape
    dm_pad = wot.shape[1]

    kernel = partial(_fused_kernel, num_heads=num_heads, d_pad=d_pad)

    out = pl.pallas_call(
        kernel,
        out_shape=jax.ShapeDtypeStruct((B, S, dm_pad), jnp.float32),
        grid=(1,),                                  # batch folded into the block
        in_specs=[
            pl.BlockSpec((B, S, d_model), lambda i: (0, 0, 0)),
            pl.BlockSpec(wqkv.shape, lambda i: (0, 0)),
            pl.BlockSpec(bqkv.shape, lambda i: (0, 0)),
            pl.BlockSpec(wot.shape, lambda i: (0, 0)),
            pl.BlockSpec(bo.shape, lambda i: (0, 0)),
        ],
        out_specs=pl.BlockSpec((B, S, dm_pad), lambda i: (0, 0, 0)),
        scratch_shapes=[pltpu.VMEM((B * S, num_heads * d_pad), jnp.bfloat16)],
        compiler_params=pltpu.CompilerParams(
            dimension_semantics=("arbitrary",)),
    )(x, wqkv, bqkv, wot, bo)

    return out[:, :, :d_model]                      # drop the lane padding


# ------------------------- params & pure-JAX reference ---------------------- #

def init_params(key, head_dims, d_model):
    """Deterministic init mirroring nn.Linear's default U(-1/sqrt(fan_in), ...)."""
    params = {"heads": []}
    dim_size = 0
    for dims in head_dims:
        d_h = len(dims)
        dim_size += d_h
        bound = 1.0 / math.sqrt(d_h)
        keys = jax.random.split(key, 7)
        key = keys[0]
        head = {
            "wq": jax.random.uniform(keys[1], (d_h, d_h), jnp.float32, -bound, bound),
            "bq": jax.random.uniform(keys[2], (d_h,), jnp.float32, -bound, bound),
            "wk": jax.random.uniform(keys[3], (d_h, d_h), jnp.float32, -bound, bound),
            "bk": jax.random.uniform(keys[4], (d_h,), jnp.float32, -bound, bound),
            "wv": jax.random.uniform(keys[5], (d_h, d_h), jnp.float32, -bound, bound),
            "bv": jax.random.uniform(keys[6], (d_h,), jnp.float32, -bound, bound),
        }
        params["heads"].append(head)
    bound = 1.0 / math.sqrt(dim_size)
    k1, k2, _ = jax.random.split(key, 3)
    params["wo"] = jax.random.uniform(k1, (d_model, dim_size), jnp.float32, -bound, bound)
    params["bo"] = jax.random.uniform(k2, (d_model,), jnp.float32, -bound, bound)
    return params


def reference(x, params, head_dims):
    """Plain-JAX (f32) replica of the PyTorch forward, for validation."""
    outs = []
    for h, dims in enumerate(head_dims):
        p = params["heads"][h]
        a = jnp.take(x, jnp.asarray(dims), axis=2)
        q = a @ p["wq"].T + p["bq"]
        k = a @ p["wk"].T + p["bk"]
        v = a @ p["wv"].T + p["bv"]
        d_h = len(dims)
        scores = jnp.einsum("bqd,bkd->bqk", q, k) / math.sqrt(d_h)
        pa = jax.nn.softmax(scores, axis=-1)
        outs.append(jnp.einsum("bqk,bkd->bqd", pa, v))
    cat = jnp.concatenate(outs, axis=2)
    return cat @ params["wo"].T + params["bo"]


# ----------------------------------- main ------------------------------------ #

if __name__ == "__main__":
    d_model = 6
    head_dims = [[0, 2], [1, 3, 4], [5, 0]]       # all indices < d_model
    B, S = 2, 8

    key = jax.random.PRNGKey(0)
    key, kx = jax.random.split(key)
    x = jax.random.normal(kx, (B, S, d_model), dtype=jnp.float32)
    params = init_params(key, head_dims, d_model)

    # Built once at init time (hoisted out of the per-forward path).
    wqkv, bqkv, wot, bo, H, d_pad = build_fused_params(params, head_dims, d_model)

    out = associated_attention(x, wqkv, bqkv, wot, bo, num_heads=H, d_pad=d_pad)
    out = jax.block_until_ready(out)

    ref = reference(x, params, head_dims)
    assert out.shape == (B, S, d_model), out.shape
    # bf16 MXU operands (with f32 accumulation and f32 softmax) give ~1e-2
    # relative error against the pure-f32 reference; tolerance documented.
    assert jnp.allclose(out, ref, atol=5e-2, rtol=5e-2), \
        float(jnp.max(jnp.abs(out - ref)))
    print("KERNEL_OK")
</pallas_src>

<mosaic_0001>
module attributes {stable_mosaic.version = 11 : i64} {
  func.func @_fused_kernel(%arg0: i32, %arg1: memref<2x8x6xf32, #tpu.memory_space<vmem>>, %arg2: memref<6x1152xbf16, #tpu.memory_space<vmem>>, %arg3: memref<1x1152xf32, #tpu.memory_space<vmem>>, %arg4: memref<384x128xbf16, #tpu.memory_space<vmem>>, %arg5: memref<1x128xf32, #tpu.memory_space<vmem>>, %arg6: memref<2x8x128xf32, #tpu.memory_space<vmem>>, %arg7: memref<16x384xbf16, #tpu.memory_space<vmem>>) attributes {dimension_semantics = [#tpu.dimension_semantics<arbitrary>], iteration_bounds = array<i64: 1>, scalar_prefetch = 0 : i64, scratch_operands = 1 : i64, tpu.core_type = #tpu.core_type<tc>, window_params = [{pipeline_mode = #tpu.pipeline_mode<synchronous>, transform_indices = @transform_0, window_bounds = array<i64: 2, 8, 6>}, {pipeline_mode = #tpu.pipeline_mode<synchronous>, transform_indices = @transform_1, window_bounds = array<i64: 6, 1152>}, {pipeline_mode = #tpu.pipeline_mode<synchronous>, transform_indices = @transform_2, window_bounds = array<i64: 1, 1152>}, {pipeline_mode = #tpu.pipeline_mode<synchronous>, transform_indices = @transform_3, window_bounds = array<i64: 384, 128>}, {pipeline_mode = #tpu.pipeline_mode<synchronous>, transform_indices = @transform_4, window_bounds = array<i64: 1, 128>}, {pipeline_mode = #tpu.pipeline_mode<synchronous>, transform_indices = @transform_5, window_bounds = array<i64: 2, 8, 128>}]} {
    %c0 = arith.constant 0 : index
    %c0_0 = arith.constant 0 : index
    %c0_1 = arith.constant 0 : index
    %0 = vector.load %arg1[%c0, %c0_0, %c0_1] : memref<2x8x6xf32, #tpu.memory_space<vmem>>, vector<2x8x6xf32>
    %1 = vector.shape_cast %0 : vector<2x8x6xf32> to vector<16x6xf32>
    %2 = arith.truncf %1 : vector<16x6xf32> to vector<16x6xbf16>
    %c0_2 = arith.constant 0 : index
    %c0_3 = arith.constant 0 : index
    %3 = vector.load %arg2[%c0_2, %c0_3] : memref<6x1152xbf16, #tpu.memory_space<vmem>>, vector<6x1152xbf16>
    %cst = arith.constant dense<0.000000e+00> : vector<16x1152xf32>
    %4 = tpu.matmul %2, %3, %cst {dimension_numbers = #tpu.dot_dimension_numbers<[1], [0], [0], [1], [0, 0, 1, 1], [], []>} : vector<16x6xbf16>, vector<6x1152xbf16>, vector<16x1152xf32> -> vector<16x1152xf32>
    %c0_4 = arith.constant 0 : index
    %c0_5 = arith.constant 0 : index
    %5 = vector.load %arg3[%c0_4, %c0_5] : memref<1x1152xf32, #tpu.memory_space<vmem>>, vector<1x1152xf32>
    %6 = vector.broadcast %5 : vector<1x1152xf32> to vector<16x1152xf32>
    %7 = arith.addf %4, %6 : vector<16x1152xf32>
    %8 = vector.shape_cast %7 : vector<16x1152xf32> to vector<2x8x1152xf32>
    %9 = vector.extract_strided_slice %8 {offsets = [0, 0, 0], sizes = [2, 8, 128], strides = [1, 1, 1]} : vector<2x8x1152xf32> to vector<2x8x128xf32>
    %10 = arith.truncf %9 : vector<2x8x128xf32> to vector<2x8x128xbf16>
    %11 = vector.extract_strided_slice %8 {offsets = [0, 0, 384], sizes = [2, 8, 128], strides = [1, 1, 1]} : vector<2x8x1152xf32> to vector<2x8x128xf32>
    %12 = arith.truncf %11 : vector<2x8x128xf32> to vector<2x8x128xbf16>
    %13 = vector.extract_strided_slice %8 {offsets = [0, 0, 768], sizes = [2, 8, 128], strides = [1, 1, 1]} : vector<2x8x1152xf32> to vector<2x8x128xf32>
    %14 = arith.truncf %13 : vector<2x8x128xf32> to vector<2x8x128xbf16>
    %cst_6 = arith.constant dense<0.000000e+00> : vector<2x8x8xf32>
    %15 = tpu.matmul %10, %12, %cst_6 {dimension_numbers = #tpu.dot_dimension_numbers<[2], [2], [1], [1], [0, 0, 0, 1, 1, 1], [0], [0]>} : vector<2x8x128xbf16>, vector<2x8x128xbf16>, vector<2x8x8xf32> -> vector<2x8x8xf32>
    %cst_7 = arith.constant dense<0xFF800000> : vector<2x8xf32>
    %16 = vector.multi_reduction <maximumf>, %15, %cst_7 [2] : vector<2x8x8xf32> to vector<2x8xf32>
    %17 = vector.shape_cast %16 : vector<2x8xf32> to vector<2x8x1xf32>
    %18 = vector.broadcast %17 : vector<2x8x1xf32> to vector<2x8x8xf32>
    %19 = arith.subf %15, %18 : vector<2x8x8xf32>
    %20 = math.exp %19 : vector<2x8x8xf32>
    %cst_8 = arith.constant dense<0.000000e+00> : vector<2x8xf32>
    %21 = vector.multi_reduction <add>, %20, %cst_8 [2] : vector<2x8x8xf32> to vector<2x8xf32>
    %22 = vector.shape_cast %21 : vector<2x8xf32> to vector<2x8x1xf32>
    %23 = vector.broadcast %22 : vector<2x8x1xf32> to vector<2x8x8xf32>
    %24 = arith.divf %20, %23 : vector<2x8x8xf32>
    %25 = arith.truncf %24 : vector<2x8x8xf32> to vector<2x8x8xbf16>
    %cst_9 = arith.constant dense<0.000000e+00> : vector<2x8x128xf32>
    %26 = tpu.matmul %25, %14, %cst_9 {dimension_numbers = #tpu.dot_dimension_numbers<[2], [1], [1], [2], [0, 0, 0, 1, 1, 2], [0], [0]>} : vector<2x8x8xbf16>, vector<2x8x128xbf16>, vector<2x8x128xf32> -> vector<2x8x128xf32>
    %27 = vector.shape_cast %26 : vector<2x8x128xf32> to vector<16x128xf32>
    %28 = arith.truncf %27 : vector<16x128xf32> to vector<16x128xbf16>
    %c0_10 = arith.constant 0 : index
    %c0_11 = arith.constant 0 : index
    %29 = vector.load %arg7[%c0_10, %c0_11] : memref<16x384xbf16, #tpu.memory_space<vmem>>, vector<16x128xbf16>
    tpu.vector_store %arg7[%c0_10, %c0_11], %28 {strides = array<i32>} : memref<16x384xbf16, #tpu.memory_space<vmem>>, vector<16x128xbf16>,
    %30 = vector.extract_strided_slice %8 {offsets = [0, 0, 128], sizes = [2, 8, 128], strides = [1, 1, 1]} : vector<2x8x1152xf32> to vector<2x8x128xf32>
    %31 = arith.truncf %30 : vector<2x8x128xf32> to vector<2x8x128xbf16>
    %32 = vector.extract_strided_slice %8 {offsets = [0, 0, 512], sizes = [2, 8, 128], strides = [1, 1, 1]} : vector<2x8x1152xf32> to vector<2x8x128xf32>
    %33 = arith.truncf %32 : vector<2x8x128xf32> to vector<2x8x128xbf16>
    %34 = vector.extract_strided_slice %8 {offsets = [0, 0, 896], sizes = [2, 8, 128], strides = [1, 1, 1]} : vector<2x8x1152xf32> to vector<2x8x128xf32>
    %35 = arith.truncf %34 : vector<2x8x128xf32> to vector<2x8x128xbf16>
    %cst_12 = arith.constant dense<0.000000e+00> : vector<2x8x8xf32>
    %36 = tpu.matmul %31, %33, %cst_12 {dimension_numbers = #tpu.dot_dimension_numbers<[2], [2], [1], [1], [0, 0, 0, 1, 1, 1], [0], [0]>} : vector<2x8x128xbf16>, vector<2x8x128xbf16>, vector<2x8x8xf32> -> vector<2x8x8xf32>
    %cst_13 = arith.constant dense<0xFF800000> : vector<2x8xf32>
    %37 = vector.multi_reduction <maximumf>, %36, %cst_13 [2] : vector<2x8x8xf32> to vector<2x8xf32>
    %38 = vector.shape_cast %37 : vector<2x8xf32> to vector<2x8x1xf32>
    %39 = vector.broadcast %38 : vector<2x8x1xf32> to vector<2x8x8xf32>
    %40 = arith.subf %36, %39 : vector<2x8x8xf32>
    %41 = math.exp %40 : vector<2x8x8xf32>
    %cst_14 = arith.constant dense<0.000000e+00> : vector<2x8xf32>
    %42 = vector.multi_reduction <add>, %41, %cst_14 [2] : vector<2x8x8xf32> to vector<2x8xf32>
    %43 = vector.shape_cast %42 : vector<2x8xf32> to vector<2x8x1xf32>
    %44 = vector.broadcast %43 : vector<2x8x1xf32> to vector<2x8x8xf32>
    %45 = arith.divf %41, %44 : vector<2x8x8xf32>
    %46 = arith.truncf %45 : vector<2x8x8xf32> to vector<2x8x8xbf16>
    %cst_15 = arith.constant dense<0.000000e+00> : vector<2x8x128xf32>
    %47 = tpu.matmul %46, %35, %cst_15 {dimension_numbers = #tpu.dot_dimension_numbers<[2], [1], [1], [2], [0, 0, 0, 1, 1, 2], [0], [0]>} : vector<2x8x8xbf16>, vector<2x8x128xbf16>, vector<2x8x128xf32> -> vector<2x8x128xf32>
    %48 = vector.shape_cast %47 : vector<2x8x128xf32> to vector<16x128xf32>
    %49 = arith.truncf %48 : vector<16x128xf32> to vector<16x128xbf16>
    %c0_16 = arith.constant 0 : index
    %c128 = arith.constant 128 : index
    %50 = vector.load %arg7[%c0_16, %c128] : memref<16x384xbf16, #tpu.memory_space<vmem>>, vector<16x128xbf16>
    tpu.vector_store %arg7[%c0_16, %c128], %49 {strides = array<i32>} : memref<16x384xbf16, #tpu.memory_space<vmem>>, vector<16x128xbf16>,
    %51 = vector.extract_strided_slice %8 {offsets = [0, 0, 256], sizes = [2, 8, 128], strides = [1, 1, 1]} : vector<2x8x1152xf32> to vector<2x8x128xf32>
    %52 = arith.truncf %51 : vector<2x8x128xf32> to vector<2x8x128xbf16>
    %53 = vector.extract_strided_slice %8 {offsets = [0, 0, 640], sizes = [2, 8, 128], strides = [1, 1, 1]} : vector<2x8x1152xf32> to vector<2x8x128xf32>
    %54 = arith.truncf %53 : vector<2x8x128xf32> to vector<2x8x128xbf16>
    %55 = vector.extract_strided_slice %8 {offsets = [0, 0, 1024], sizes = [2, 8, 128], strides = [1, 1, 1]} : vector<2x8x1152xf32> to vector<2x8x128xf32>
    %56 = arith.truncf %55 : vector<2x8x128xf32> to vector<2x8x128xbf16>
    %cst_17 = arith.constant dense<0.000000e+00> : vector<2x8x8xf32>
    %57 = tpu.matmul %52, %54, %cst_17 {dimension_numbers = #tpu.dot_dimension_numbers<[2], [2], [1], [1], [0, 0, 0, 1, 1, 1], [0], [0]>} : vector<2x8x128xbf16>, vector<2x8x128xbf16>, vector<2x8x8xf32> -> vector<2x8x8xf32>
    %cst_18 = arith.constant dense<0xFF800000> : vector<2x8xf32>
    %58 = vector.multi_reduction <maximumf>, %57, %cst_18 [2] : vector<2x8x8xf32> to vector<2x8xf32>
    %59 = vector.shape_cast %58 : vector<2x8xf32> to vector<2x8x1xf32>
    %60 = vector.broadcast %59 : vector<2x8x1xf32> to vector<2x8x8xf32>
    %61 = arith.subf %57, %60 : vector<2x8x8xf32>
    %62 = math.exp %61 : vector<2x8x8xf32>
    %cst_19 = arith.constant dense<0.000000e+00> : vector<2x8xf32>
    %63 = vector.multi_reduction <add>, %62, %cst_19 [2] : vector<2x8x8xf32> to vector<2x8xf32>
    %64 = vector.shape_cast %63 : vector<2x8xf32> to vector<2x8x1xf32>
    %65 = vector.broadcast %64 : vector<2x8x1xf32> to vector<2x8x8xf32>
    %66 = arith.divf %62, %65 : vector<2x8x8xf32>
    %67 = arith.truncf %66 : vector<2x8x8xf32> to vector<2x8x8xbf16>
    %cst_20 = arith.constant dense<0.000000e+00> : vector<2x8x128xf32>
    %68 = tpu.matmul %67, %56, %cst_20 {dimension_numbers = #tpu.dot_dimension_numbers<[2], [1], [1], [2], [0, 0, 0, 1, 1, 2], [0], [0]>} : vector<2x8x8xbf16>, vector<2x8x128xbf16>, vector<2x8x128xf32> -> vector<2x8x128xf32>
    %69 = vector.shape_cast %68 : vector<2x8x128xf32> to vector<16x128xf32>
    %70 = arith.truncf %69 : vector<16x128xf32> to vector<16x128xbf16>
    %c0_21 = arith.constant 0 : index
    %c256 = arith.constant 256 : index
    %71 = vector.load %arg7[%c0_21, %c256] : memref<16x384xbf16, #tpu.memory_space<vmem>>, vector<16x128xbf16>
    tpu.vector_store %arg7[%c0_21, %c256], %70 {strides = array<i32>} : memref<16x384xbf16, #tpu.memory_space<vmem>>, vector<16x128xbf16>,
    %c0_22 = arith.constant 0 : index
    %c0_23 = arith.constant 0 : index
    %72 = vector.load %arg7[%c0_22, %c0_23] : memref<16x384xbf16, #tpu.memory_space<vmem>>, vector<16x384xbf16>
    %c0_24 = arith.constant 0 : index
    %c0_25 = arith.constant 0 : index
    %73 = vector.load %arg4[%c0_24, %c0_25] : memref<384x128xbf16, #tpu.memory_space<vmem>>, vector<384x128xbf16>
    %cst_26 = arith.constant dense<0.000000e+00> : vector<16x128xf32>
    %74 = tpu.matmul %72, %73, %cst_26 {dimension_numbers = #tpu.dot_dimension_numbers<[1], [0], [0], [1], [0, 0, 1, 1], [], []>} : vector<16x384xbf16>, vector<384x128xbf16>, vector<16x128xf32> -> vector<16x128xf32>
    %c0_27 = arith.constant 0 : index
    %c0_28 = arith.constant 0 : index
    %75 = vector.load %arg5[%c0_27, %c0_28] : memref<1x128xf32, #tpu.memory_space<vmem>>, vector<1x128xf32>
    %76 = vector.broadcast %75 : vector<1x128xf32> to vector<16x128xf32>
    %77 = arith.addf %74, %76 : vector<16x128xf32>
    %78 = vector.shape_cast %77 : vector<16x128xf32> to vector<2x8x128xf32>
    %c0_29 = arith.constant 0 : index
    %c0_30 = arith.constant 0 : index
    %c0_31 = arith.constant 0 : index
    %79 = vector.load %arg6[%c0_29, %c0_30, %c0_31] : memref<2x8x128xf32, #tpu.memory_space<vmem>>, vector<2x8x128xf32>
    tpu.vector_store %arg6[%c0_29, %c0_30, %c0_31], %78 {strides = array<i32>} : memref<2x8x128xf32, #tpu.memory_space<vmem>>, vector<2x8x128xf32>,
    return
  }
  func.func @transform_0(%arg0: i32) -> (i32, i32, i32) {
    %c0_i32 = arith.constant 0 : i32
    %c0_i32_0 = arith.constant 0 : i32
    %c0_i32_1 = arith.constant 0 : i32
    %c0_i32_2 = arith.constant 0 : i32
    return %c0_i32, %c0_i32_0, %c0_i32_1 : i32, i32, i32
  }
  func.func @transform_1(%arg0: i32) -> (i32, i32) {
    %c0_i32 = arith.constant 0 : i32
    %c0_i32_0 = arith.constant 0 : i32
    %c0_i32_1 = arith.constant 0 : i32
    return %c0_i32, %c0_i32_0 : i32, i32
  }
  func.func @transform_2(%arg0: i32) -> (i32, i32) {
    %c0_i32 = arith.constant 0 : i32
    %c0_i32_0 = arith.constant 0 : i32
    %c0_i32_1 = arith.constant 0 : i32
    return %c0_i32, %c0_i32_0 : i32, i32
  }
  func.func @transform_3(%arg0: i32) -> (i32, i32) {
    %c0_i32 = arith.constant 0 : i32
    %c0_i32_0 = arith.constant 0 : i32
    %c0_i32_1 = arith.constant 0 : i32
    return %c0_i32, %c0_i32_0 : i32, i32
  }
  func.func @transform_4(%arg0: i32) -> (i32, i32) {
    %c0_i32 = arith.constant 0 : i32
    %c0_i32_0 = arith.constant 0 : i32
    %c0_i32_1 = arith.constant 0 : i32
    return %c0_i32, %c0_i32_0 : i32, i32
  }
  func.func @transform_5(%arg0: i32) -> (i32, i32, i32) {
    %c0_i32 = arith.constant 0 : i32
    %c0_i32_0 = arith.constant 0 : i32
    %c0_i32_1 = arith.constant 0 : i32
    %c0_i32_2 = arith.constant 0 : i32
    return %c0_i32, %c0_i32_0, %c0_i32_1 : i32, i32, i32
  }
}

</mosaic_0001>

<llo_original>
// kernel: associated_attention.1
$region0: #{associated_attention.1}
  #allocation0 [shape = 'u32[]', space=smem, size = 0x4, offset = 0x4, fixed_abs, tag = 'smem constant byte address 0x4 - core index']
  #allocation1 [shape = 'u32[144,128]{1,0:T(1,128)}', space=vmem, size = 0x12000, scoped, tag = 'internal scratch']
  #allocation2 [shape = 'bf16[16,384]{1,0:T(16,128)(2,1)}', space=vmem, size = 0x3000, scoped, tag = 'scratch operand']
  %s0 = inlined_call_operand.vmem [shape: f32[2,8,6], index: 0, kind: input, shape index: {}]
  %s1 = inlined_call_operand.hbm [shape: bf16[6,1152], index: 1, kind: input, shape index: {}]
  %s2 = inlined_call_operand.vmem [shape: f32[1,1152], index: 2, kind: input, shape index: {}]
  %s3 = inlined_call_operand.hbm [shape: bf16[384,128], index: 3, kind: input, shape index: {}]
  %s4 = inlined_call_operand.vmem [shape: f32[1,128], index: 4, kind: input, shape index: {}]
  %s5 = inlined_call_operand.vmem [shape: f32[2,8,128], index: 5, kind: output, shape index: {}]
  %s6 = sld [smem:[#allocation0]]
  $region38: #{associated_attention.1} parent=0
    _
  %s8 = ssub.s32 1, %s6
  %s9 = scalar_select 0, %s8, %s6
  $region1: #{associated_attention.1} parent=0
    #allocation3 [shape = 'u8[18432]{0}', space=vmem, size = 0x4800, scoped, tag = 'input window, operand 1, single buffered']
    #allocation4 [shape = 's32[1]{0}', space=sflag, size = 0x4, scoped, tag = 'scoped memory for associated_attention.1']
    #allocation5 [shape = 'u8[98304]{0}', space=vmem, size = 0x18000, scoped, tag = 'input window, operand 3, single buffered']
    #allocation6 [shape = 's32[1]{0}', space=sflag, size = 0x4, scoped, tag = 'scoped memory for associated_attention.1']
    %10 = vsyncpa [#allocation4], 0
    %11 = vsyncpa [#allocation6], 0
    // Predicated region
    $region2: #{associated_attention.1} parent=1 // pred_check
      _
    $region3: #{associated_attention.1} parent=1 // pred_check_branch
      %13 = sbr.rel (0) target = $region5
    $region4: #{associated_attention.1} parent=1 // pred_region
      _
    $region5: #{associated_attention.1} parent=1 // pred_fallthru
      _
    // Predicated region
    $region6: #{associated_attention.1} parent=1 // pred_check
      _
    $region7: #{associated_attention.1} parent=1 // pred_check_branch
      %15 = sbr.rel (0) target = $region9
    $region8: #{associated_attention.1} parent=1 // pred_region
      %s17 = ssub.s32 576, 576
      %18 = vsyncadd [#allocation4], %s17
      %s20 = sshll.u32 [#allocation3], 4
      %s21 = int_to_ptr.vmem [resolvable:$true] %s20
      %23 = dma.hbm_to_vmem [thread:$0]  %s1, 576, %s21, [#allocation4]
    $region9: #{associated_attention.1} parent=1 // pred_fallthru
      _
    // Predicated region
    $region10: #{associated_attention.1} parent=1 // pred_check
      _
    $region11: #{associated_attention.1} parent=1 // pred_check_branch
      %25 = sbr.rel (0) target = $region13
    $region12: #{associated_attention.1} parent=1 // pred_region
      _
    $region13: #{associated_attention.1} parent=1 // pred_fallthru
      _
    // Predicated region
    $region14: #{associated_attention.1} parent=1 // pred_check
      _
    $region15: #{associated_attention.1} parent=1 // pred_check_branch
      %27 = sbr.rel (0) target = $region17
    $region16: #{associated_attention.1} parent=1 // pred_region
      %s29 = ssub.s32 3072, 3072
      %30 = vsyncadd [#allocation6], %s29
      %s31 = sshll.u32 [#allocation5], 4
      %s32 = int_to_ptr.vmem [resolvable:$true] %s31
      %37 = dma.hbm_to_vmem [thread:$0]  %s3, 3072, %s32, [#allocation6], 64, 64, 4
    $region17: #{associated_attention.1} parent=1 // pred_fallthru
      _
    // Predicated region
    $region18: #{associated_attention.1} parent=1 // pred_check
      _
    $region19: #{associated_attention.1} parent=1 // pred_check_branch
      %39 = sbr.rel (0) target = $region21
    $region20: #{associated_attention.1} parent=1 // pred_region
      _
    $region21: #{associated_attention.1} parent=1 // pred_fallthru
      _
    // Predicated region
    $region22: #{associated_attention.1} parent=1 // pred_check
      _
    $region23: #{associated_attention.1} parent=1 // pred_check_branch
      %41 = sbr.rel (0) target = $region25
    $region24: #{associated_attention.1} parent=1 // pred_region
      %42 = dma.done [#allocation4], 576
    $region25: #{associated_attention.1} parent=1 // pred_fallthru
      _
    // Predicated region
    $region26: #{associated_attention.1} parent=1 // pred_check
      _
    $region27: #{associated_attention.1} parent=1 // pred_check_branch
      %44 = sbr.rel (0) target = $region29
    $region28: #{associated_attention.1} parent=1 // pred_region
      %45 = dma.done [#allocation6], 3072
    $region29: #{associated_attention.1} parent=1 // pred_fallthru
      _
    %v47 = vld [vmem:[%s0] sm:$0xff]
    %v48 = vld [vmem:[%s0 + $0x8] sm:$0xff]
    %v49 = vpack.c.bf16 %v48, %v47
    %v50 = vld [vmem:[#allocation3] sm:$0x77]
    %v51 = vld [vmem:[#allocation3 + $0x8] sm:$0x77]
    %v52 = vld [vmem:[#allocation3 + $0x10] sm:$0x77]
    %v53 = vld [vmem:[#allocation3 + $0x18] sm:$0x77]
    %v54 = vld [vmem:[#allocation3 + $0x20] sm:$0x7]
    %v55 = vld [vmem:[%s2] sm:$0xff]
    %v56 = vld [vmem:[%s2 + $0x8] sm:$0x1]
    %v59 = vlaneseq
    %v60 = vshrl.u32 %v59, 7
    %v61 = vsub.s32 0, %v60
    %v62 = vrot.slane %v55, %v61
    %v63 = vlaneseq
    %v64 = vshrl.u32 %v63, 7
    %v65 = vsub.s32 1, %v64
    %v66 = vrot.slane %v55, %v65
    %v67 = vlaneseq
    %v68 = vshrl.u32 %v67, 7
    %v69 = vsub.s32 2, %v68
    %v70 = vrot.slane %v55, %v69
    %v71 = vlaneseq
    %v72 = vshrl.u32 %v71, 7
    %v73 = vsub.s32 3, %v72
    %v74 = vrot.slane %v55, %v73
    %v75 = vlaneseq
    %v76 = vshrl.u32 %v75, 7
    %v77 = vsub.s32 4, %v76
    %v78 = vrot.slane %v55, %v77
    %v79 = vlaneseq
    %v80 = vshrl.u32 %v79, 7
    %v81 = vsub.s32 5, %v80
    %v82 = vrot.slane %v55, %v81
    %v83 = vlaneseq
    %v84 = vshrl.u32 %v83, 7
    %v85 = vsub.s32 6, %v84
    %v86 = vrot.slane %v55, %v85
    %v87 = vlaneseq
    %v88 = vshrl.u32 %v87, 7
    %v89 = vsub.s32 7, %v88
    %v90 = vrot.slane %v55, %v89
    %v91 = vlaneseq
    %v92 = vshrl.u32 %v91, 7
    %v93 = vsub.s32 0, %v92
    %v94 = vrot.slane %v56, %v93
    %v109 = vunpack.c.l.b16 %v50
    %v110 = vunpack.c.h.b16 %v50
    %v111 = vunpack.c.l.b16 %v51
    %v112 = vunpack.c.h.b16 %v51
    %v113 = vunpack.c.l.b16 %v52
    %v114 = vunpack.c.h.b16 %v52
    %v115 = vunpack.c.l.b16 %v53
    %v116 = vunpack.c.h.b16 %v53
    %v117 = vunpack.c.l.b16 %v54
    %v118 = vpack.c.b16 %v109, %v109
    %v119 = vpack.c.b16 %v110, %v110
    %v120 = vpack.c.b16 %v111, %v111
    %v121 = vpack.c.b16 %v112, %v112
    %v122 = vpack.c.b16 %v113, %v113
    %v123 = vpack.c.b16 %v114, %v114
    %v124 = vpack.c.b16 %v115, %v115
    %v125 = vpack.c.b16 %v116, %v116
    %v126 = vpack.c.b16 %v117, %v117
    %vm127 = vcmask 48128
    %v129 = vsel %vm127, %v49, 0
    %vm131 = vcmask 1042432
    %v133 = vsel %vm131, %v118, 0
    %v136 = vsel %vm131, %v119, 0
    %v139 = vsel %vm131, %v120, 0
    %v142 = vsel %vm131, %v121, 0
    %v145 = vsel %vm131, %v122, 0
    %v148 = vsel %vm131, %v123, 0
    %v151 = vsel %vm131, %v124, 0
    %v154 = vsel %vm131, %v125, 0
    %v157 = vsel %vm131, %v126, 0
    %159 = vmatprep.subr.bf16.mxu0 %v136
    %160 = vmatpush1.bf16.msra.mxu0 %v133
    %161 = vmatprep.subr.bf16.mxu0 0
    %162 = vmatpush1.bf16.msra.mxu0 0
    %163 = vmatprep.subr.bf16.mxu0 0
    %164 = vmatpush1.bf16.msra.mxu0 0
    %165 = vmatprep.subr.bf16.mxu0 0
    %166 = vmatpush1.bf16.msra.mxu0 0
    %167 = vmatprep.subr.bf16.mxu0 0
    %168 = vmatpush1.bf16.msra.mxu0 0
    %169 = vmatprep.subr.bf16.mxu0 0
    %170 = vmatpush1.bf16.msra.mxu0 0
    %171 = vmatprep.subr.bf16.mxu0 0
    %172 = vmatpush1.bf16.msra.mxu0 0
    %173 = vmatprep.subr.bf16.mxu0 0
    %174 = vmatpush1.bf16.msra.mxu0 0
    %175 = vmatprep.subr.bf16.mxu0 0
    %176 = vmatpush1.bf16.msra.mxu0 0
    %177 = vmatprep.subr.bf16.mxu0 0
    %178 = vmatpush1.bf16.msra.mxu0 0
    %179 = vmatprep.subr.bf16.mxu0 0
    %180 = vmatpush1.bf16.msra.mxu0 0
    %181 = vmatprep.subr.bf16.mxu0 0
    %182 = vmatpush1.bf16.msra.mxu0 0
    %183 = vmatprep.subr.bf16.mxu0 0
    %184 = vmatpush1.bf16.msra.mxu0 0
    %185 = vmatprep.subr.bf16.mxu0 0
    %186 = vmatpush1.bf16.msra.mxu0 0
    %187 = vmatprep.subr.bf16.mxu0 0
    %188 = vmatpush1.bf16.msra.mxu0 0
    %189 = vmatprep.subr.bf16.mxu0 0
    %190 = vmatpush1.bf16.msra.mxu0 0
    %191 = vmatprep.mubr.bf16.mxu0 0
    %192 = vmatmul.mubr.bf16.gmra.mrb[0].mxu0 %v129
    %v193 = vpop.f32.mrb[0].mxu0
    %v194 = vadd.f32 %v62, %v193
    %v195 = vpop.f32.mrb[0].mxu0
    %v196 = vadd.f32 %v66, %v195
    %v197 = vpop.f32.mrb[0].mxu0
    %v198 = vadd.f32 %v62, %v197
    %v199 = vpop.f32.mrb[0].mxu0
    %v200 = vadd.f32 %v66, %v199
    %201 = vdwg.mxu0
    %202 = vmatprep.subr.bf16.mxu0 %v142
    %203 = vmatpush1.bf16.msra.mxu0 %v139
    %204 = vmatprep.subr.bf16.mxu0 0
    %205 = vmatpush1.bf16.msra.mxu0 0
    %206 = vmatprep.subr.bf16.mxu0 0
    %207 = vmatpush1.bf16.msra.mxu0 0
    %208 = vmatprep.subr.bf16.mxu0 0
    %209 = vmatpush1.bf16.msra.mxu0 0
    %210 = vmatprep.subr.bf16.mxu0 0
    %211 = vmatpush1.bf16.msra.mxu0 0
    %212 = vmatprep.subr.bf16.mxu0 0
    %213 = vmatpush1.bf16.msra.mxu0 0
    %214 = vmatprep.subr.bf16.mxu0 0
    %215 = vmatpush1.bf16.msra.mxu0 0
    %216 = vmatprep.subr.bf16.mxu0 0
    %217 = vmatpush1.bf16.msra.mxu0 0
    %218 = vmatprep.subr.bf16.mxu0 0
    %219 = vmatpush1.bf16.msra.mxu0 0
    %220 = vmatprep.subr.bf16.mxu0 0
    %221 = vmatpush1.bf16.msra.mxu0 0
    %222 = vmatprep.subr.bf16.mxu0 0
    %223 = vmatpush1.bf16.msra.mxu0 0
    %224 = vmatprep.subr.bf16.mxu0 0
    %225 = vmatpush1.bf16.msra.mxu0 0
    %226 = vmatprep.subr.bf16.mxu0 0
    %227 = vmatpush1.bf16.msra.mxu0 0
    %228 = vmatprep.subr.bf16.mxu0 0
    %229 = vmatpush1.bf16.msra.mxu0 0
    %230 = vmatprep.subr.bf16.mxu0 0
    %231 = vmatpush1.bf16.msra.mxu0 0
    %232 = vmatprep.subr.bf16.mxu0 0
    %233 = vmatpush1.bf16.msra.mxu0 0
    %234 = vmatprep.mubr.bf16.mxu0 0
    %235 = vmatmul.mubr.bf16.gmra.mrb[0].mxu0 %v129
    %v236 = vpop.f32.mrb[0].mxu0
    %v237 = vadd.f32 %v70, %v236
    %v238 = vpop.f32.mrb[0].mxu0
    %v239 = vadd.f32 %v74, %v238
    %v240 = vpop.f32.mrb[0].mxu0
    %v241 = vadd.f32 %v70, %v240
    %v242 = vpop.f32.mrb[0].mxu0
    %v243 = vadd.f32 %v74, %v242
    %244 = vdwg.mxu0
    %245 = vmatprep.subr.bf16.mxu0 %v148
    %246 = vmatpush1.bf16.msra.mxu0 %v145
    %247 = vmatprep.subr.bf16.mxu0 0
    %248 = vmatpush1.bf16.msra.mxu0 0
    %249 = vmatprep.subr.bf16.mxu0 0
    %250 = vmatpush1.bf16.msra.mxu0 0
    %251 = vmatprep.subr.bf16.mxu0 0
    %252 = vmatpush1.bf16.msra.mxu0 0
    %253 = vmatprep.subr.bf16.mxu0 0
    %254 = vmatpush1.bf16.msra.mxu0 0
    %255 = vmatprep.subr.bf16.mxu0 0
    %256 = vmatpush1.bf16.msra.mxu0 0
    %257 = vmatprep.subr.bf16.mxu0 0
    %258 = vmatpush1.bf16.msra.mxu0 0
    %259 = vmatprep.subr.bf16.mxu0 0
    %260 = vmatpush1.bf16.msra.mxu0 0
    %261 = vmatprep.subr.bf16.mxu0 0
    %262 = vmatpush1.bf16.msra.mxu0 0
    %263 = vmatprep.subr.bf16.mxu0 0
    %264 = vmatpush1.bf16.msra.mxu0 0
    %265 = vmatprep.subr.bf16.mxu0 0
    %266 = vmatpush1.bf16.msra.mxu0 0
    %267 = vmatprep.subr.bf16.mxu0 0
    %268 = vmatpush1.bf16.msra.mxu0 0
    %269 = vmatprep.subr.bf16.mxu0 0
    %270 = vmatpush1.bf16.msra.mxu0 0
    %271 = vmatprep.subr.bf16.mxu0 0
    %272 = vmatpush1.bf16.msra.mxu0 0
    %273 = vmatprep.subr.bf16.mxu0 0
    %274 = vmatpush1.bf16.msra.mxu0 0
    %275 = vmatprep.subr.bf16.mxu0 0
    %276 = vmatpush1.bf16.msra.mxu0 0
    %277 = vmatprep.mubr.bf16.mxu0 0
    %278 = vmatmul.mubr.bf16.gmra.mrb[0].mxu0 %v129
    %v279 = vpop.f32.mrb[0].mxu0
    %v280 = vadd.f32 %v78, %v279
    %v281 = vpop.f32.mrb[0].mxu0
    %v282 = vadd.f32 %v82, %v281
    %v283 = vpop.f32.mrb[0].mxu0
    %v284 = vadd.f32 %v78, %v283
    %v285 = vpop.f32.mrb[0].mxu0
    %v286 = vadd.f32 %v82, %v285
    %287 = vdwg.mxu0
    %288 = vmatprep.subr.bf16.mxu0 %v154
    %289 = vmatpush1.bf16.msra.mxu0 %v151
    %290 = vmatprep.subr.bf16.mxu0 0
    %291 = vmatpush1.bf16.msra.mxu0 0
    %292 = vmatprep.subr.bf16.mxu0 0
    %293 = vmatpush1.bf16.msra.mxu0 0
    %294 = vmatprep.subr.bf16.mxu0 0
    %295 = vmatpush1.bf16.msra.mxu0 0
    %296 = vmatprep.subr.bf16.mxu0 0
    %297 = vmatpush1.bf16.msra.mxu0 0
    %298 = vmatprep.subr.bf16.mxu0 0
    %299 = vmatpush1.bf16.msra.mxu0 0
    %300 = vmatprep.subr.bf16.mxu0 0
    %301 = vmatpush1.bf16.msra.mxu0 0
    %302 = vmatprep.subr.bf16.mxu0 0
    %303 = vmatpush1.bf16.msra.mxu0 0
    %304 = vmatprep.subr.bf16.mxu0 0
    %305 = vmatpush1.bf16.msra.mxu0 0
    %306 = vmatprep.subr.bf16.mxu0 0
    %307 = vmatpush1.bf16.msra.mxu0 0
    %308 = vmatprep.subr.bf16.mxu0 0
    %309 = vmatpush1.bf16.msra.mxu0 0
    %310 = vmatprep.subr.bf16.mxu0 0
    %311 = vmatpush1.bf16.msra.mxu0 0
    %312 = vmatprep.subr.bf16.mxu0 0
    %313 = vmatpush1.bf16.msra.mxu0 0
    %314 = vmatprep.subr.bf16.mxu0 0
    %315 = vmatpush1.bf16.msra.mxu0 0
    %316 = vmatprep.subr.bf16.mxu0 0
    %317 = vmatpush1.bf16.msra.mxu0 0
    %318 = vmatprep.subr.bf16.mxu0 0
    %319 = vmatpush1.bf16.msra.mxu0 0
    %320 = vmatprep.mubr.bf16.mxu0 0
    %321 = vmatmul.mubr.bf16.gmra.mrb[0].mxu0 %v129
    %v322 = vpop.f32.mrb[0].mxu0
    %v323 = vadd.f32 %v86, %v322
    %v324 = vpop.f32.mrb[0].mxu0
    %v325 = vadd.f32 %v90, %v324
    %v326 = vpop.f32.mrb[0].mxu0
    %v327 = vadd.f32 %v86, %v326
    %v328 = vpop.f32.mrb[0].mxu0
    %v329 = vadd.f32 %v90, %v328
    %330 = vdwg.mxu0
    %331 = vmatprep.subr.bf16.mxu0 0
    %332 = vmatpush1.bf16.msra.mxu0 %v157
    %333 = vmatprep.subr.bf16.mxu0 0
    %334 = vmatpush1.bf16.msra.mxu0 0
    %335 = vmatprep.subr.bf16.mxu0 0
    %336 = vmatpush1.bf16.msra.mxu0 0
    %337 = vmatprep.subr.bf16.mxu0 0
    %338 = vmatpush1.bf16.msra.mxu0 0
    %339 = vmatprep.subr.bf16.mxu0 0
    %340 = vmatpush1.bf16.msra.mxu0 0
    %341 = vmatprep.subr.bf16.mxu0 0
    %342 = vmatpush1.bf16.msra.mxu0 0
    %343 = vmatprep.subr.bf16.mxu0 0
    %344 = vmatpush1.bf16.msra.mxu0 0
    %345 = vmatprep.subr.bf16.mxu0 0
    %346 = vmatpush1.bf16.msra.mxu0 0
    %347 = vmatprep.subr.bf16.mxu0 0
    %348 = vmatpush1.bf16.msra.mxu0 0
    %349 = vmatprep.subr.bf16.mxu0 0
    %350 = vmatpush1.bf16.msra.mxu0 0
    %351 = vmatprep.subr.bf16.mxu0 0
    %352 = vmatpush1.bf16.msra.mxu0 0
    %353 = vmatprep.subr.bf16.mxu0 0
    %354 = vmatpush1.bf16.msra.mxu0 0
    %355 = vmatprep.subr.bf16.mxu0 0
    %356 = vmatpush1.bf16.msra.mxu0 0
    %357 = vmatprep.subr.bf16.mxu0 0
    %358 = vmatpush1.bf16.msra.mxu0 0
    %359 = vmatprep.subr.bf16.mxu0 0
    %360 = vmatpush1.bf16.msra.mxu0 0
    %361 = vmatprep.subr.bf16.mxu0 0
    %362 = vmatpush1.bf16.msra.mxu0 0
    %363 = vmatprep.mubr.bf16.mxu0 0
    %364 = vmatmul.mubr.bf16.gmra.mrb[0].mxu0 %v129
    %v365 = vpop.f32.mrb[0].mxu0
    %v366 = vadd.f32 %v94, %v365
    %v367 = vpop.f32.mrb[0].mxu0
    %v368 = vpop.f32.mrb[0].mxu0
    %v369 = vadd.f32 %v94, %v368
    %v370 = vpop.f32.mrb[0].mxu0
    %371 = vdwg.mxu0
    %v372 = vpack.c.bf16 %v194, %v194
    %v373 = vpack.c.bf16 %v198, %v198
    %v374 = vpack.c.bf16 %v239, %v239
    %v375 = vpack.c.bf16 %v243, %v243
    %v376 = vpack.c.bf16 %v323, %v323
    %v377 = vpack.c.bf16 %v327, %v327
    %378 = vmatprep.subr.bf16.mxu0 0
    %379 = vmatpush1.bf16.xpose.msra.mxu0 %v374
    %380 = vmatprep.subr.bf16.mxu0 0
    %381 = vmatpush1.bf16.xpose.msra.mxu0 0
    %382 = vmatprep.subr.bf16.mxu0 0
    %383 = vmatpush1.bf16.xpose.msra.mxu0 0
    %384 = vmatprep.subr.bf16.mxu0 0
    %385 = vmatpush1.bf16.xpose.msra.mxu0 0
    %386 = vmatprep.subr.bf16.mxu0 0
    %387 = vmatpush1.bf16.xpose.msra.mxu0 0
    %388 = vmatprep.subr.bf16.mxu0 0
    %389 = vmatpush1.bf16.xpose.msra.mxu0 0
    %390 = vmatprep.subr.bf16.mxu0 0
    %391 = vmatpush1.bf16.xpose.msra.mxu0 0
    %392 = vmatprep.subr.bf16.mxu0 0
    %393 = vmatpush1.bf16.xpose.msra.mxu0 0
    %394 = vmatprep.subr.bf16.mxu0 0
    %395 = vmatpush1.bf16.xpose.msra.mxu0 0
    %396 = vmatprep.subr.bf16.mxu0 0
    %397 = vmatpush1.bf16.xpose.msra.mxu0 0
    %398 = vmatprep.subr.bf16.mxu0 0
    %399 = vmatpush1.bf16.xpose.msra.mxu0 0
    %400 = vmatprep.subr.bf16.mxu0 0
    %401 = vmatpush1.bf16.xpose.msra.mxu0 0
    %402 = vmatprep.subr.bf16.mxu0 0
    %403 = vmatpush1.bf16.xpose.msra.mxu0 0
    %404 = vmatprep.subr.bf16.mxu0 0
    %405 = vmatpush1.bf16.xpose.msra.mxu0 0
    %406 = vmatprep.subr.bf16.mxu0 0
    %407 = vmatpush1.bf16.xpose.msra.mxu0 0
    %408 = vmatprep.subr.bf16.mxu0 0
    %409 = vmatpush1.bf16.xpose.msra.mxu0 0
    %410 = vmatprep.mubr.bf16.mxu0 0
    %411 = vmatmul.mubr.bf16.gmra.mrb[0].mxu0 %v372
    %v412 = vpop.f32.mrb[0].mxu0
    %v413 = vadd.f32 0.0, %v412
    %v414 = vpop.f32.mrb[0].mxu0
    %v415 = vpop.f32.mrb[0].mxu0
    %v416 = vpop.f32.mrb[0].mxu0
    %417 = vdwg.mxu0
    %418 = vmatprep.subr.bf16.mxu0 0
    %419 = vmatpush1.bf16.xpose.msra.mxu0 %v375
    %420 = vmatprep.subr.bf16.mxu0 0
    %421 = vmatpush1.bf16.xpose.msra.mxu0 0
    %422 = vmatprep.subr.bf16.mxu0 0
    %423 = vmatpush1.bf16.xpose.msra.mxu0 0
    %424 = vmatprep.subr.bf16.mxu0 0
    %425 = vmatpush1.bf16.xpose.msra.mxu0 0
    %426 = vmatprep.subr.bf16.mxu0 0
    %427 = vmatpush1.bf16.xpose.msra.mxu0 0
    %428 = vmatprep.subr.bf16.mxu0 0
    %429 = vmatpush1.bf16.xpose.msra.mxu0 0
    %430 = vmatprep.subr.bf16.mxu0 0
    %431 = vmatpush1.bf16.xpose.msra.mxu0 0
    %432 = vmatprep.subr.bf16.mxu0 0
    %433 = vmatpush1.bf16.xpose.msra.mxu0 0
    %434 = vmatprep.subr.bf16.mxu0 0
    %435 = vmatpush1.bf16.xpose.msra.mxu0 0
    %436 = vmatprep.subr.bf16.mxu0 0
    %437 = vmatpush1.bf16.xpose.msra.mxu0 0
    %438 = vmatprep.subr.bf16.mxu0 0
    %439 = vmatpush1.bf16.xpose.msra.mxu0 0
    %440 = vmatprep.subr.bf16.mxu0 0
    %441 = vmatpush1.bf16.xpose.msra.mxu0 0
    %442 = vmatprep.subr.bf16.mxu0 0
    %443 = vmatpush1.bf16.xpose.msra.mxu0 0
    %444 = vmatprep.subr.bf16.mxu0 0
    %445 = vmatpush1.bf16.xpose.msra.mxu0 0
    %446 = vmatprep.subr.bf16.mxu0 0
    %447 = vmatpush1.bf16.xpose.msra.mxu0 0
    %448 = vmatprep.subr.bf16.mxu0 0
    %449 = vmatpush1.bf16.xpose.msra.mxu0 0
    %450 = vmatprep.mubr.bf16.mxu0 0
    %451 = vmatmul.mubr.bf16.gmra.mrb[0].mxu0 %v373
    %v452 = vpop.f32.mrb[0].mxu0
    %v453 = vadd.f32 0.0, %v452
    %v454 = vpop.f32.mrb[0].mxu0
    %v455 = vpop.f32.mrb[0].mxu0
    %v456 = vpop.f32.mrb[0].mxu0
    %457 = vdwg.mxu0
    %vm458 = vcmask 64512
    %v459 = vsel %vm458, %v413, -inf
    %460 = vmax.xlane.f32.xlu0 %v459
    %v461 = vpop.xlane.xlu0 %460
    %v462 = vsel %vm458, %v453, -inf
    %463 = vmax.xlane.f32.xlu0 %v462
    %v464 = vpop.xlane.xlu0 %463
    %v465 = vsub.f32 %v413, %v461
    %v466 = vsub.f32 %v453, %v464
    %v467 = vmul.f32 %v465, 1.442695
    %v468 = vpow.pop %v467
    %v469 = vmul.f32 %v466, 1.442695
    %v470 = vpow.pop %v469
    %v471 = vsel %vm458, %v468, 0.0
    %472 = vadd.xlane.f32.xlu0 %v471
    %v473 = vpop.xlane.xlu0 %472
    %v474 = vsel %vm458, %v470, 0.0
    %475 = vadd.xlane.f32.xlu0 %v474
    %v476 = vpop.xlane.xlu0 %475
    %v477 = vrcp.pop %v473
    %v478 = vmul.f32 %v468, %v477
    %v479 = vrcp.pop %v476
    %v480 = vmul.f32 %v470, %v479
    %v481 = vpack.c.bf16 %v478, %v478
    %v482 = vpack.c.bf16 %v480, %v480
    %v484 = vsel %vm458, %v481, 0
    %vm486 = vcmask 1043456
    %v488 = vsel %vm486, %v376, 0
    %490 = vmatprep.subr.bf16.mxu0 0
    %491 = vmatpush1.bf16.msra.mxu0 %v488
    %492 = vmatprep.subr.bf16.mxu0 0
    %493 = vmatpush1.bf16.msra.mxu0 0
    %494 = vmatprep.subr.bf16.mxu0 0
    %495 = vmatpush1.bf16.msra.mxu0 0
    %496 = vmatprep.subr.bf16.mxu0 0
    %497 = vmatpush1.bf16.msra.mxu0 0
    %498 = vmatprep.subr.bf16.mxu0 0
    %499 = vmatpush1.bf16.msra.mxu0 0
    %500 = vmatprep.subr.bf16.mxu0 0
    %501 = vmatpush1.bf16.msra.mxu0 0
    %502 = vmatprep.subr.bf16.mxu0 0
    %503 = vmatpush1.bf16.msra.mxu0 0
    %504 = vmatprep.subr.bf16.mxu0 0
    %505 = vmatpush1.bf16.msra.mxu0 0
    %506 = vmatprep.subr.bf16.mxu0 0
    %507 = vmatpush1.bf16.msra.mxu0 0
    %508 = vmatprep.subr.bf16.mxu0 0
    %509 = vmatpush1.bf16.msra.mxu0 0
    %510 = vmatprep.subr.bf16.mxu0 0
    %511 = vmatpush1.bf16.msra.mxu0 0
    %512 = vmatprep.subr.bf16.mxu0 0
    %513 = vmatpush1.bf16.msra.mxu0 0
    %514 = vmatprep.subr.bf16.mxu0 0
    %515 = vmatpush1.bf16.msra.mxu0 0
    %516 = vmatprep.subr.bf16.mxu0 0
    %517 = vmatpush1.bf16.msra.mxu0 0
    %518 = vmatprep.subr.bf16.mxu0 0
    %519 = vmatpush1.bf16.msra.mxu0 0
    %520 = vmatprep.subr.bf16.mxu0 0
    %521 = vmatpush1.bf16.msra.mxu0 0
    %522 = vmatprep.mubr.bf16.mxu0 0
    %523 = vmatmul.mubr.bf16.gmra.mrb[0].mxu0 %v484
    %v524 = vpop.f32.mrb[0].mxu0
    %v525 = vadd.f32 0.0, %v524
    %v526 = vpop.f32.mrb[0].mxu0
    %v527 = vpop.f32.mrb[0].mxu0
    %v528 = vpop.f32.mrb[0].mxu0
    %529 = vdwg.mxu0
    %v531 = vsel %vm458, %v482, 0
    %v534 = vsel %vm486, %v377, 0
    %536 = vmatprep.subr.bf16.mxu0 0
    %537 = vmatpush1.bf16.msra.mxu0 %v534
    %538 = vmatprep.subr.bf16.mxu0 0
    %539 = vmatpush1.bf16.msra.mxu0 0
    %540 = vmatprep.subr.bf16.mxu0 0
    %541 = vmatpush1.bf16.msra.mxu0 0
    %542 = vmatprep.subr.bf16.mxu0 0
    %543 = vmatpush1.bf16.msra.mxu0 0
    %544 = vmatprep.subr.bf16.mxu0 0
    %545 = vmatpush1.bf16.msra.mxu0 0
    %546 = vmatprep.subr.bf16.mxu0 0
    %547 = vmatpush1.bf16.msra.mxu0 0
    %548 = vmatprep.subr.bf16.mxu0 0
    %549 = vmatpush1.bf16.msra.mxu0 0
    %550 = vmatprep.subr.bf16.mxu0 0
    %551 = vmatpush1.bf16.msra.mxu0 0
    %552 = vmatprep.subr.bf16.mxu0 0
    %553 = vmatpush1.bf16.msra.mxu0 0
    %554 = vmatprep.subr.bf16.mxu0 0
    %555 = vmatpush1.bf16.msra.mxu0 0
    %556 = vmatprep.subr.bf16.mxu0 0
    %557 = vmatpush1.bf16.msra.mxu0 0
    %558 = vmatprep.subr.bf16.mxu0 0
    %559 = vmatpush1.bf16.msra.mxu0 0
    %560 = vmatprep.subr.bf16.mxu0 0
    %561 = vmatpush1.bf16.msra.mxu0 0
    %562 = vmatprep.subr.bf16.mxu0 0
    %563 = vmatpush1.bf16.msra.mxu0 0
    %564 = vmatprep.subr.bf16.mxu0 0
    %565 = vmatpush1.bf16.msra.mxu0 0
    %566 = vmatprep.subr.bf16.mxu0 0
    %567 = vmatpush1.bf16.msra.mxu0 0
    %568 = vmatprep.mubr.bf16.mxu0 0
    %569 = vmatmul.mubr.bf16.gmra.mrb[0].mxu0 %v531
    %v570 = vpop.f32.mrb[0].mxu0
    %v571 = vadd.f32 0.0, %v570
    %v572 = vpop.f32.mrb[0].mxu0
    %v573 = vpop.f32.mrb[0].mxu0
    %v574 = vpop.f32.mrb[0].mxu0
    %575 = vdwg.mxu0
    %v576 = vpack.c.bf16 %v571, %v525
    %577 = vst [vmem:[#allocation2] sm:$0xff] %v576
    %v578 = vpack.c.bf16 %v196, %v196
    %v579 = vpack.c.bf16 %v200, %v200
    %v580 = vpack.c.bf16 %v280, %v280
    %v581 = vpack.c.bf16 %v284, %v284
    %v582 = vpack.c.bf16 %v325, %v325
    %v583 = vpack.c.bf16 %v329, %v329
    %584 = vmatprep.subr.bf16.mxu0 0
    %585 = vmatpush1.bf16.xpose.msra.mxu0 %v580
    %586 = vmatprep.subr.bf16.mxu0 0
    %587 = vmatpush1.bf16.xpose.msra.mxu0 0
    %588 = vmatprep.subr.bf16.mxu0 0
    %589 = vmatpush1.bf16.xpose.msra.mxu0 0
    %590 = vmatprep.subr.bf16.mxu0 0
    %591 = vmatpush1.bf16.xpose.msra.mxu0 0
    %592 = vmatprep.subr.bf16.mxu0 0
    %593 = vmatpush1.bf16.xpose.msra.mxu0 0
    %594 = vmatprep.subr.bf16.mxu0 0
    %595 = vmatpush1.bf16.xpose.msra.mxu0 0
    %596 = vmatprep.subr.bf16.mxu0 0
    %597 = vmatpush1.bf16.xpose.msra.mxu0 0
    %598 = vmatprep.subr.bf16.mxu0 0
    %599 = vmatpush1.bf16.xpose.msra.mxu0 0
    %600 = vmatprep.subr.bf16.mxu0 0
    %601 = vmatpush1.bf16.xpose.msra.mxu0 0
    %602 = vmatprep.subr.bf16.mxu0 0
    %603 = vmatpush1.bf16.xpose.msra.mxu0 0
    %604 = vmatprep.subr.bf16.mxu0 0
    %605 = vmatpush1.bf16.xpose.msra.mxu0 0
    %606 = vmatprep.subr.bf16.mxu0 0
    %607 = vmatpush1.bf16.xpose.msra.mxu0 0
    %608 = vmatprep.subr.bf16.mxu0 0
    %609 = vmatpush1.bf16.xpose.msra.mxu0 0
    %610 = vmatprep.subr.bf16.mxu0 0
    %611 = vmatpush1.bf16.xpose.msra.mxu0 0
    %612 = vmatprep.subr.bf16.mxu0 0
    %613 = vmatpush1.bf16.xpose.msra.mxu0 0
    %614 = vmatprep.subr.bf16.mxu0 0
    %615 = vmatpush1.bf16.xpose.msra.mxu0 0
    %616 = vmatprep.mubr.bf16.mxu0 0
    %617 = vmatmul.mubr.bf16.gmra.mrb[0].mxu0 %v578
    %v618 = vpop.f32.mrb[0].mxu0
    %v619 = vadd.f32 0.0, %v618
    %v620 = vpop.f32.mrb[0].mxu0
    %v621 = vpop.f32.mrb[0].mxu0
    %v622 = vpop.f32.mrb[0].mxu0
    %623 = vdwg.mxu0
    %624 = vmatprep.subr.bf16.mxu0 0
    %625 = vmatpush1.bf16.xpose.msra.mxu0 %v581
    %626 = vmatprep.subr.bf16.mxu0 0
    %627 = vmatpush1.bf16.xpose.msra.mxu0 0
    %628 = vmatprep.subr.bf16.mxu0 0
    %629 = vmatpush1.bf16.xpose.msra.mxu0 0
    %630 = vmatprep.subr.bf16.mxu0 0
    %631 = vmatpush1.bf16.xpose.msra.mxu0 0
    %632 = vmatprep.subr.bf16.mxu0 0
    %633 = vmatpush1.bf16.xpose.msra.mxu0 0
    %634 = vmatprep.subr.bf16.mxu0 0
    %635 = vmatpush1.bf16.xpose.msra.mxu0 0
    %636 = vmatprep.subr.bf16.mxu0 0
    %637 = vmatpush1.bf16.xpose.msra.mxu0 0
    %638 = vmatprep.subr.bf16.mxu0 0
    %639 = vmatpush1.bf16.xpose.msra.mxu0 0
    %640 = vmatprep.subr.bf16.mxu0 0
    %641 = vmatpush1.bf16.xpose.msra.mxu0 0
    %642 = vmatprep.subr.bf16.mxu0 0
    %643 = vmatpush1.bf16.xpose.msra.mxu0 0
    %644 = vmatprep.subr.bf16.mxu0 0
    %645 = vmatpush1.bf16.xpose.msra.mxu0 0
    %646 = vmatprep.subr.bf16.mxu0 0
    %647 = vmatpush1.bf16.xpose.msra.mxu0 0
    %648 = vmatprep.subr.bf16.mxu0 0
    %649 = vmatpush1.bf16.xpose.msra.mxu0 0
    %650 = vmatprep.subr.bf16.mxu0 0
    %651 = vmatpush1.bf16.xpose.msra.mxu0 0
    %652 = vmatprep.subr.bf16.mxu0 0
    %653 = vmatpush1.bf16.xpose.msra.mxu0 0
    %654 = vmatprep.subr.bf16.mxu0 0
    %655 = vmatpush1.bf16.xpose.msra.mxu0 0
    %656 = vmatprep.mubr.bf16.mxu0 0
    %657 = vmatmul.mubr.bf16.gmra.mrb[0].mxu0 %v579
    %v658 = vpop.f32.mrb[0].mxu0
    %v659 = vadd.f32 0.0, %v658
    %v660 = vpop.f32.mrb[0].mxu0
    %v661 = vpop.f32.mrb[0].mxu0
    %v662 = vpop.f32.mrb[0].mxu0
    %663 = vdwg.mxu0
    %v664 = vsel %vm458, %v619, -inf
    %665 = vmax.xlane.f32.xlu0 %v664
    %v666 = vpop.xlane.xlu0 %665
    %v667 = vsel %vm458, %v659, -inf
    %668 = vmax.xlane.f32.xlu0 %v667
    %v669 = vpop.xlane.xlu0 %668
    %v670 = vsub.f32 %v619, %v666
    %v671 = vsub.f32 %v659, %v669
    %v672 = vmul.f32 %v670, 1.442695
    %v673 = vpow.pop %v672
    %v674 = vmul.f32 %v671, 1.442695
    %v675 = vpow.pop %v674
    %v676 = vsel %vm458, %v673, 0.0
    %677 = vadd.xlane.f32.xlu0 %v676
    %v678 = vpop.xlane.xlu0 %677
    %v679 = vsel %vm458, %v675, 0.0
    %680 = vadd.xlane.f32.xlu0 %v679
    %v681 = vpop.xlane.xlu0 %680
    %v682 = vrcp.pop %v678
    %v683 = vmul.f32 %v673, %v682
    %v684 = vrcp.pop %v681
    %v685 = vmul.f32 %v675, %v684
    %v686 = vpack.c.bf16 %v683, %v683
    %v687 = vpack.c.bf16 %v685, %v685
    %v689 = vsel %vm458, %v686, 0
    %v692 = vsel %vm486, %v582, 0
    %694 = vmatprep.subr.bf16.mxu0 0
    %695 = vmatpush1.bf16.msra.mxu0 %v692
    %696 = vmatprep.subr.bf16.mxu0 0
    %697 = vmatpush1.bf16.msra.mxu0 0
    %698 = vmatprep.subr.bf16.mxu0 0
    %699 = vmatpush1.bf16.msra.mxu0 0
    %700 = vmatprep.subr.bf16.mxu0 0
    %701 = vmatpush1.bf16.msra.mxu0 0
    %702 = vmatprep.subr.bf16.mxu0 0
    %703 = vmatpush1.bf16.msra.mxu0 0
    %704 = vmatprep.subr.bf16.mxu0 0
    %705 = vmatpush1.bf16.msra.mxu0 0
    %706 = vmatprep.subr.bf16.mxu0 0
    %707 = vmatpush1.bf16.msra.mxu0 0
    %708 = vmatprep.subr.bf16.mxu0 0
    %709 = vmatpush1.bf16.msra.mxu0 0
    %710 = vmatprep.subr.bf16.mxu0 0
    %711 = vmatpush1.bf16.msra.mxu0 0
    %712 = vmatprep.subr.bf16.mxu0 0
    %713 = vmatpush1.bf16.msra.mxu0 0
    %714 = vmatprep.subr.bf16.mxu0 0
    %715 = vmatpush1.bf16.msra.mxu0 0
    %716 = vmatprep.subr.bf16.mxu0 0
    %717 = vmatpush1.bf16.msra.mxu0 0
    %718 = vmatprep.subr.bf16.mxu0 0
    %719 = vmatpush1.bf16.msra.mxu0 0
    %720 = vmatprep.subr.bf16.mxu0 0
    %721 = vmatpush1.bf16.msra.mxu0 0
    %722 = vmatprep.subr.bf16.mxu0 0
    %723 = vmatpush1.bf16.msra.mxu0 0
    %724 = vmatprep.subr.bf16.mxu0 0
    %725 = vmatpush1.bf16.msra.mxu0 0
    %726 = vmatprep.mubr.bf16.mxu0 0
    %727 = vmatmul.mubr.bf16.gmra.mrb[0].mxu0 %v689
    %v728 = vpop.f32.mrb[0].mxu0
    %v729 = vadd.f32 0.0, %v728
    %v730 = vpop.f32.mrb[0].mxu0
    %v731 = vpop.f32.mrb[0].mxu0
    %v732 = vpop.f32.mrb[0].mxu0
    %733 = vdwg.mxu0
    %v735 = vsel %vm458, %v687, 0
    %v738 = vsel %vm486, %v583, 0
    %740 = vmatprep.subr.bf16.mxu0 0
    %741 = vmatpush1.bf16.msra.mxu0 %v738
    %742 = vmatprep.subr.bf16.mxu0 0
    %743 = vmatpush1.bf16.msra.mxu0 0
    %744 = vmatprep.subr.bf16.mxu0 0
    %745 = vmatpush1.bf16.msra.mxu0 0
    %746 = vmatprep.subr.bf16.mxu0 0
    %747 = vmatpush1.bf16.msra.mxu0 0
    %748 = vmatprep.subr.bf16.mxu0 0
    %749 = vmatpush1.bf16.msra.mxu0 0
    %750 = vmatprep.subr.bf16.mxu0 0
    %751 = vmatpush1.bf16.msra.mxu0 0
    %752 = vmatprep.subr.bf16.mxu0 0
    %753 = vmatpush1.bf16.msra.mxu0 0
    %754 = vmatprep.subr.bf16.mxu0 0
    %755 = vmatpush1.bf16.msra.mxu0 0
    %756 = vmatprep.subr.bf16.mxu0 0
    %757 = vmatpush1.bf16.msra.mxu0 0
    %758 = vmatprep.subr.bf16.mxu0 0
    %759 = vmatpush1.bf16.msra.mxu0 0
    %760 = vmatprep.subr.bf16.mxu0 0
    %761 = vmatpush1.bf16.msra.mxu0 0
    %762 = vmatprep.subr.bf16.mxu0 0
    %763 = vmatpush1.bf16.msra.mxu0 0
    %764 = vmatprep.subr.bf16.mxu0 0
    %765 = vmatpush1.bf16.msra.mxu0 0
    %766 = vmatprep.subr.bf16.mxu0 0
    %767 = vmatpush1.bf16.msra.mxu0 0
    %768 = vmatprep.subr.bf16.mxu0 0
    %769 = vmatpush1.bf16.msra.mxu0 0
    %770 = vmatprep.subr.bf16.mxu0 0
    %771 = vmatpush1.bf16.msra.mxu0 0
    %772 = vmatprep.mubr.bf16.mxu0 0
    %773 = vmatmul.mubr.bf16.gmra.mrb[0].mxu0 %v735
    %v774 = vpop.f32.mrb[0].mxu0
    %v775 = vadd.f32 0.0, %v774
    %v776 = vpop.f32.mrb[0].mxu0
    %v777 = vpop.f32.mrb[0].mxu0
    %v778 = vpop.f32.mrb[0].mxu0
    %779 = vdwg.mxu0
    %v780 = vpack.c.bf16 %v775, %v729
    %781 = vst [vmem:[#allocation2 + $0x8] sm:$0xff] %v780
    %v782 = vpack.c.bf16 %v237, %v237
    %v783 = vpack.c.bf16 %v241, %v241
    %v784 = vpack.c.bf16 %v282, %v282
    %v785 = vpack.c.bf16 %v286, %v286
    %v786 = vpack.c.bf16 %v366, %v366
    %v787 = vpack.c.bf16 %v369, %v369
    %788 = vmatprep.subr.bf16.mxu0 0
    %789 = vmatpush1.bf16.xpose.msra.mxu0 %v784
    %790 = vmatprep.subr.bf16.mxu0 0
    %791 = vmatpush1.bf16.xpose.msra.mxu0 0
    %792 = vmatprep.subr.bf16.mxu0 0
    %793 = vmatpush1.bf16.xpose.msra.mxu0 0
    %794 = vmatprep.subr.bf16.mxu0 0
    %795 = vmatpush1.bf16.xpose.msra.mxu0 0
    %796 = vmatprep.subr.bf16.mxu0 0
    %797 = vmatpush1.bf16.xpose.msra.mxu0 0
    %798 = vmatprep.subr.bf16.mxu0 0
    %799 = vmatpush1.bf16.xpose.msra.mxu0 0
    %800 = vmatprep.subr.bf16.mxu0 0
    %801 = vmatpush1.bf16.xpose.msra.mxu0 0
    %802 = vmatprep.subr.bf16.mxu0 0
    %803 = vmatpush1.bf16.xpose.msra.mxu0 0
    %804 = vmatprep.subr.bf16.mxu0 0
    %805 = vmatpush1.bf16.xpose.msra.mxu0 0
    %806 = vmatprep.subr.bf16.mxu0 0
    %807 = vmatpush1.bf16.xpose.msra.mxu0 0
    %808 = vmatprep.subr.bf16.mxu0 0
    %809 = vmatpush1.bf16.xpose.msra.mxu0 0
    %810 = vmatprep.subr.bf16.mxu0 0
    %811 = vmatpush1.bf16.xpose.msra.mxu0 0
    %812 = vmatprep.subr.bf16.mxu0 0
    %813 = vmatpush1.bf16.xpose.msra.mxu0 0
    %814 = vmatprep.subr.bf16.mxu0 0
    %815 = vmatpush1.bf16.xpose.msra.mxu0 0
    %816 = vmatprep.subr.bf16.mxu0 0
    %817 = vmatpush1.bf16.xpose.msra.mxu0 0
    %818 = vmatprep.subr.bf16.mxu0 0
    %819 = vmatpush1.bf16.xpose.msra.mxu0 0
    %820 = vmatprep.mubr.bf16.mxu0 0
    %821 = vmatmul.mubr.bf16.gmra.mrb[0].mxu0 %v782
    %v822 = vpop.f32.mrb[0].mxu0
    %v823 = vadd.f32 0.0, %v822
    %v824 = vpop.f32.mrb[0].mxu0
    %v825 = vpop.f32.mrb[0].mxu0
    %v826 = vpop.f32.mrb[0].mxu0
    %827 = vdwg.mxu0
    %828 = vmatprep.subr.bf16.mxu0 0
    %829 = vmatpush1.bf16.xpose.msra.mxu0 %v785
    %830 = vmatprep.subr.bf16.mxu0 0
    %831 = vmatpush1.bf16.xpose.msra.mxu0 0
    %832 = vmatprep.subr.bf16.mxu0 0
    %833 = vmatpush1.bf16.xpose.msra.mxu0 0
    %834 = vmatprep.subr.bf16.mxu0 0
    %835 = vmatpush1.bf16.xpose.msra.mxu0 0
    %836 = vmatprep.subr.bf16.mxu0 0
    %837 = vmatpush1.bf16.xpose.msra.mxu0 0
    %838 = vmatprep.subr.bf16.mxu0 0
    %839 = vmatpush1.bf16.xpose.msra.mxu0 0
    %840 = vmatprep.subr.bf16.mxu0 0
    %841 = vmatpush1.bf16.xpose.msra.mxu0 0
    %842 = vmatprep.subr.bf16.mxu0 0
    %843 = vmatpush1.bf16.xpose.msra.mxu0 0
    %844 = vmatprep.subr.bf16.mxu0 0
    %845 = vmatpush1.bf16.xpose.msra.mxu0 0
    %846 = vmatprep.subr.bf16.mxu0 0
    %847 = vmatpush1.bf16.xpose.msra.mxu0 0
    %848 = vmatprep.subr.bf16.mxu0 0
    %849 = vmatpush1.bf16.xpose.msra.mxu0 0
    %850 = vmatprep.subr.bf16.mxu0 0
    %851 = vmatpush1.bf16.xpose.msra.mxu0 0
    %852 = vmatprep.subr.bf16.mxu0 0
    %853 = vmatpush1.bf16.xpose.msra.mxu0 0
    %854 = vmatprep.subr.bf16.mxu0 0
    %855 = vmatpush1.bf16.xpose.msra.mxu0 0
    %856 = vmatprep.subr.bf16.mxu0 0
    %857 = vmatpush1.bf16.xpose.msra.mxu0 0
    %858 = vmatprep.subr.bf16.mxu0 0
    %859 = vmatpush1.bf16.xpose.msra.mxu0 0
    %860 = vmatprep.mubr.bf16.mxu0 0
    %861 = vmatmul.mubr.bf16.gmra.mrb[0].mxu0 %v783
    %v862 = vpop.f32.mrb[0].mxu0
    %v863 = vadd.f32 0.0, %v862
    %v864 = vpop.f32.mrb[0].mxu0
    %v865 = vpop.f32.mrb[0].mxu0
    %v866 = vpop.f32.mrb[0].mxu0
    %867 = vdwg.mxu0
    %v868 = vsel %vm458, %v823, -inf
    %869 = vmax.xlane.f32.xlu0 %v868
    %v870 = vpop.xlane.xlu0 %869
    %v871 = vsel %vm458, %v863, -inf
    %872 = vmax.xlane.f32.xlu0 %v871
    %v873 = vpop.xlane.xlu0 %872
    %v874 = vsub.f32 %v823, %v870
    %v875 = vsub.f32 %v863, %v873
    %v876 = vmul.f32 %v874, 1.442695
    %v877 = vpow.pop %v876
    %v878 = vmul.f32 %v875, 1.442695
    %v879 = vpow.pop %v878
    %v880 = vsel %vm458, %v877, 0.0
    %881 = vadd.xlane.f32.xlu0 %v880
    %v882 = vpop.xlane.xlu0 %881
    %v883 = vsel %vm458, %v879, 0.0
    %884 = vadd.xlane.f32.xlu0 %v883
    %v885 = vpop.xlane.xlu0 %884
    %v886 = vrcp.pop %v882
    %v887 = vmul.f32 %v877, %v886
    %v888 = vrcp.pop %v885
    %v889 = vmul.f32 %v879, %v888
    %v890 = vpack.c.bf16 %v887, %v887
    %v891 = vpack.c.bf16 %v889, %v889
    %v893 = vsel %vm458, %v890, 0
    %v896 = vsel %vm486, %v786, 0
    %898 = vmatprep.subr.bf16.mxu0 0
    %899 = vmatpush1.bf16.msra.mxu0 %v896
    %900 = vmatprep.subr.bf16.mxu0 0
    %901 = vmatpush1.bf16.msra.mxu0 0
    %902 = vmatprep.subr.bf16.mxu0 0
    %903 = vmatpush1.bf16.msra.mxu0 0
    %904 = vmatprep.subr.bf16.mxu0 0
    %905 = vmatpush1.bf16.msra.mxu0 0
    %906 = vmatprep.subr.bf16.mxu0 0
    %907 = vmatpush1.bf16.msra.mxu0 0
    %908 = vmatprep.subr.bf16.mxu0 0
    %909 = vmatpush1.bf16.msra.mxu0 0
    %910 = vmatprep.subr.bf16.mxu0 0
    %911 = vmatpush1.bf16.msra.mxu0 0
    %912 = vmatprep.subr.bf16.mxu0 0
    %913 = vmatpush1.bf16.msra.mxu0 0
    %914 = vmatprep.subr.bf16.mxu0 0
    %915 = vmatpush1.bf16.msra.mxu0 0
    %916 = vmatprep.subr.bf16.mxu0 0
    %917 = vmatpush1.bf16.msra.mxu0 0
    %918 = vmatprep.subr.bf16.mxu0 0
    %919 = vmatpush1.bf16.msra.mxu0 0
    %920 = vmatprep.subr.bf16.mxu0 0
    %921 = vmatpush1.bf16.msra.mxu0 0
    %922 = vmatprep.subr.bf16.mxu0 0
    %923 = vmatpush1.bf16.msra.mxu0 0
    %924 = vmatprep.subr.bf16.mxu0 0
    %925 = vmatpush1.bf16.msra.mxu0 0
    %926 = vmatprep.subr.bf16.mxu0 0
    %927 = vmatpush1.bf16.msra.mxu0 0
    %928 = vmatprep.subr.bf16.mxu0 0
    %929 = vmatpush1.bf16.msra.mxu0 0
    %930 = vmatprep.mubr.bf16.mxu0 0
    %931 = vmatmul.mubr.bf16.gmra.mrb[0].mxu0 %v893
    %v932 = vpop.f32.mrb[0].mxu0
    %v933 = vadd.f32 0.0, %v932
    %v934 = vpop.f32.mrb[0].mxu0
    %v935 = vpop.f32.mrb[0].mxu0
    %v936 = vpop.f32.mrb[0].mxu0
    %937 = vdwg.mxu0
    %v939 = vsel %vm458, %v891, 0
    %v942 = vsel %vm486, %v787, 0
    %944 = vmatprep.subr.bf16.mxu0 0
    %945 = vmatpush1.bf16.msra.mxu0 %v942
    %946 = vmatprep.subr.bf16.mxu0 0
    %947 = vmatpush1.bf16.msra.mxu0 0
    %948 = vmatprep.subr.bf16.mxu0 0
    %949 = vmatpush1.bf16.msra.mxu0 0
    %950 = vmatprep.subr.bf16.mxu0 0
    %951 = vmatpush1.bf16.msra.mxu0 0
    %952 = vmatprep.subr.bf16.mxu0 0
    %953 = vmatpush1.bf16.msra.mxu0 0
    %954 = vmatprep.subr.bf16.mxu0 0
    %955 = vmatpush1.bf16.msra.mxu0 0
    %956 = vmatprep.subr.bf16.mxu0 0
    %957 = vmatpush1.bf16.msra.mxu0 0
    %958 = vmatprep.subr.bf16.mxu0 0
    %959 = vmatpush1.bf16.msra.mxu0 0
    %960 = vmatprep.subr.bf16.mxu0 0
    %961 = vmatpush1.bf16.msra.mxu0 0
    %962 = vmatprep.subr.bf16.mxu0 0
    %963 = vmatpush1.bf16.msra.mxu0 0
    %964 = vmatprep.subr.bf16.mxu0 0
    %965 = vmatpush1.bf16.msra.mxu0 0
    %966 = vmatprep.subr.bf16.mxu0 0
    %967 = vmatpush1.bf16.msra.mxu0 0
    %968 = vmatprep.subr.bf16.mxu0 0
    %969 = vmatpush1.bf16.msra.mxu0 0
    %970 = vmatprep.subr.bf16.mxu0 0
    %971 = vmatpush1.bf16.msra.mxu0 0
    %972 = vmatprep.subr.bf16.mxu0 0
    %973 = vmatpush1.bf16.msra.mxu0 0
    %974 = vmatprep.subr.bf16.mxu0 0
    %975 = vmatpush1.bf16.msra.mxu0 0
    %976 = vmatprep.mubr.bf16.mxu0 0
    %977 = vmatmul.mubr.bf16.gmra.mrb[0].mxu0 %v939
    %v978 = vpop.f32.mrb[0].mxu0
    %v979 = vadd.f32 0.0, %v978
    %v980 = vpop.f32.mrb[0].mxu0
    %v981 = vpop.f32.mrb[0].mxu0
    %v982 = vpop.f32.mrb[0].mxu0
    %983 = vdwg.mxu0
    %v984 = vpack.c.bf16 %v979, %v933
    %985 = vst [vmem:[#allocation2 + $0x10] sm:$0xff] %v984
    %v986 = vld [vmem:[#allocation2] sm:$0xff]
    %v987 = vld [vmem:[#allocation2 + $0x8] sm:$0xff]
    %v988 = vld [vmem:[#allocation2 + $0x10] sm:$0xff]
    %v989 = vld [vmem:[#allocation5] sm:$0xf]
    %v990 = vld [vmem:[#allocation5 + $0x4] sm:$0xf]
    %v991 = vld [vmem:[#allocation5 + $0x8] sm:$0xf]
    %v992 = vld [vmem:[#allocation5 + $0xc] sm:$0xf]
    %v993 = vld [vmem:[#allocation5 + $0x10] sm:$0xf]
    %v994 = vld [vmem:[#allocation5 + $0x14] sm:$0xf]
    %v995 = vld [vmem:[#allocation5 + $0x18] sm:$0xf]
    %v996 = vld [vmem:[#allocation5 + $0x1c] sm:$0xf]
    %v997 = vld [vmem:[#allocation5 + $0x20] sm:$0xf]
    %v998 = vld [vmem:[#allocation5 + $0x24] sm:$0xf]
    %v999 = vld [vmem:[#allocation5 + $0x28] sm:$0xf]
    %v1000 = vld [vmem:[#allocation5 + $0x2c] sm:$0xf]
    %v1001 = vld [vmem:[#allocation5 + $0x30] sm:$0xf]
    %v1002 = vld [vmem:[#allocation5 + $0x34] sm:$0xf]
    %v1003 = vld [vmem:[#allocation5 + $0x38] sm:$0xf]
    %v1004 = vld [vmem:[#allocation5 + $0x3c] sm:$0xf]
    %v1005 = vld [vmem:[#allocation5 + $0x40] sm:$0xf]
    %v1006 = vld [vmem:[#allocation5 + $0x44] sm:$0xf]
    %v1007 = vld [vmem:[#allocation5 + $0x48] sm:$0xf]
    %v1008 = vld [vmem:[#allocation5 + $0x4c] sm:$0xf]
    %v1009 = vld [vmem:[#allocation5 + $0x50] sm:$0xf]
    %v1010 = vld [vmem:[#allocation5 + $0x54] sm:$0xf]
    %v1011 = vld [vmem:[#allocation5 + $0x58] sm:$0xf]
    %v1012 = vld [vmem:[#allocation5 + $0x5c] sm:$0xf]
    %v1013 = vld [vmem:[#allocation5 + $0x60] sm:$0xf]
    %v1014 = vld [vmem:[#allocation5 + $0x64] sm:$0xf]
    %v1015 = vld [vmem:[#allocation5 + $0x68] sm:$0xf]
    %v1016 = vld [vmem:[#allocation5 + $0x6c] sm:$0xf]
    %v1017 = vld [vmem:[#allocation5 + $0x70] sm:$0xf]
    %v1018 = vld [vmem:[#allocation5 + $0x74] sm:$0xf]
    %v1019 = vld [vmem:[#allocation5 + $0x78] sm:$0xf]
    %v1020 = vld [vmem:[#allocation5 + $0x7c] sm:$0xf]
    %v1021 = vld [vmem:[#allocation5 + $0x80] sm:$0xf]
    %v1022 = vld [vmem:[#allocation5 + $0x84] sm:$0xf]
    %v1023 = vld [vmem:[#allocation5 + $0x88] sm:$0xf]
    %v1024 = vld [vmem:[#allocation5 + $0x8c] sm:$0xf]
    %v1025 = vld [vmem:[#allocation5 + $0x90] sm:$0xf]
    %v1026 = vld [vmem:[#allocation5 + $0x94] sm:$0xf]
    %v1027 = vld [vmem:[#allocation5 + $0x98] sm:$0xf]
    %v1028 = vld [vmem:[#allocation5 + $0x9c] sm:$0xf]
    %v1029 = vld [vmem:[#allocation5 + $0xa0] sm:$0xf]
    %v1030 = vld [vmem:[#allocation5 + $0xa4] sm:$0xf]
    %v1031 = vld [vmem:[#allocation5 + $0xa8] sm:$0xf]
    %v1032 = vld [vmem:[#allocation5 + $0xac] sm:$0xf]
    %v1033 = vld [vmem:[#allocation5 + $0xb0] sm:$0xf]
    %v1034 = vld [vmem:[#allocation5 + $0xb4] sm:$0xf]
    %v1035 = vld [vmem:[#allocation5 + $0xb8] sm:$0xf]
    %v1036 = vld [vmem:[#allocation5 + $0xbc] sm:$0xf]
    %v1037 = vld [vmem:[%s4] sm:$0x1]
    %v1039 = vlaneseq
    %v1040 = vshrl.u32 %v1039, 7
    %v1041 = vsub.s32 0, %v1040
    %v1042 = vrot.slane %v1037, %v1041
    %v1092 = vunpack.c.l.b16 %v989
    %v1093 = vunpack.c.l.b16 %v990
    %v1094 = vunpack.c.l.b16 %v991
    %v1095 = vunpack.c.l.b16 %v992
    %v1096 = vunpack.c.l.b16 %v993
    %v1097 = vunpack.c.l.b16 %v994
    %v1098 = vunpack.c.l.b16 %v995
    %v1099 = vunpack.c.l.b16 %v996
    %v1100 = vunpack.c.l.b16 %v997
    %v1101 = vunpack.c.l.b16 %v998
    %v1102 = vunpack.c.l.b16 %v999
    %v1103 = vunpack.c.l.b16 %v1000
    %v1104 = vunpack.c.l.b16 %v1001
    %v1105 = vunpack.c.l.b16 %v1002
    %v1106 = vunpack.c.l.b16 %v1003
    %v1107 = vunpack.c.l.b16 %v1004
    %v1108 = vunpack.c.l.b16 %v1005
    %v1109 = vunpack.c.l.b16 %v1006
    %v1110 = vunpack.c.l.b16 %v1007
    %v1111 = vunpack.c.l.b16 %v1008
    %v1112 = vunpack.c.l.b16 %v1009
    %v1113 = vunpack.c.l.b16 %v1010
    %v1114 = vunpack.c.l.b16 %v1011
    %v1115 = vunpack.c.l.b16 %v1012
    %v1116 = vunpack.c.l.b16 %v1013
    %v1117 = vunpack.c.l.b16 %v1014
    %v1118 = vunpack.c.l.b16 %v1015
    %v1119 = vunpack.c.l.b16 %v1016
    %v1120 = vunpack.c.l.b16 %v1017
    %v1121 = vunpack.c.l.b16 %v1018
    %v1122 = vunpack.c.l.b16 %v1019
    %v1123 = vunpack.c.l.b16 %v1020
    %v1124 = vunpack.c.l.b16 %v1021
    %v1125 = vunpack.c.l.b16 %v1022
    %v1126 = vunpack.c.l.b16 %v1023
    %v1127 = vunpack.c.l.b16 %v1024
    %v1128 = vunpack.c.l.b16 %v1025
    %v1129 = vunpack.c.l.b16 %v1026
    %v1130 = vunpack.c.l.b16 %v1027
    %v1131 = vunpack.c.l.b16 %v1028
    %v1132 = vunpack.c.l.b16 %v1029
    %v1133 = vunpack.c.l.b16 %v1030
    %v1134 = vunpack.c.l.b16 %v1031
    %v1135 = vunpack.c.l.b16 %v1032
    %v1136 = vunpack.c.l.b16 %v1033
    %v1137 = vunpack.c.l.b16 %v1034
    %v1138 = vunpack.c.l.b16 %v1035
    %v1139 = vunpack.c.l.b16 %v1036
    %v1140 = vpack.c.b16 %v1093, %v1092
    %v1141 = vpack.c.b16 %v1095, %v1094
    %v1142 = vpack.c.b16 %v1097, %v1096
    %v1143 = vpack.c.b16 %v1099, %v1098
    %v1144 = vpack.c.b16 %v1101, %v1100
    %v1145 = vpack.c.b16 %v1103, %v1102
    %v1146 = vpack.c.b16 %v1105, %v1104
    %v1147 = vpack.c.b16 %v1107, %v1106
    %v1148 = vpack.c.b16 %v1109, %v1108
    %v1149 = vpack.c.b16 %v1111, %v1110
    %v1150 = vpack.c.b16 %v1113, %v1112
    %v1151 = vpack.c.b16 %v1115, %v1114
    %v1152 = vpack.c.b16 %v1117, %v1116
    %v1153 = vpack.c.b16 %v1119, %v1118
    %v1154 = vpack.c.b16 %v1121, %v1120
    %v1155 = vpack.c.b16 %v1123, %v1122
    %v1156 = vpack.c.b16 %v1125, %v1124
    %v1157 = vpack.c.b16 %v1127, %v1126
    %v1158 = vpack.c.b16 %v1129, %v1128
    %v1159 = vpack.c.b16 %v1131, %v1130
    %v1160 = vpack.c.b16 %v1133, %v1132
    %v1161 = vpack.c.b16 %v1135, %v1134
    %v1162 = vpack.c.b16 %v1137, %v1136
    %v1163 = vpack.c.b16 %v1139, %v1138
    %1188 = vmatprep.subr.bf16.mxu0 0
    %1189 = vmatpush1.bf16.msra.mxu0 %v1140
    %1190 = vmatprep.subr.bf16.mxu0 0
    %1191 = vmatpush1.bf16.msra.mxu0 %v1141
    %1192 = vmatprep.subr.bf16.mxu0 0
    %1193 = vmatpush1.bf16.msra.mxu0 %v1142
    %1194 = vmatprep.subr.bf16.mxu0 0
    %1195 = vmatpush1.bf16.msra.mxu0 %v1143
    %1196 = vmatprep.subr.bf16.mxu0 0
    %1197 = vmatpush1.bf16.msra.mxu0 %v1144
    %1198 = vmatprep.subr.bf16.mxu0 0
    %1199 = vmatpush1.bf16.msra.mxu0 %v1145
    %1200 = vmatprep.subr.bf16.mxu0 0
    %1201 = vmatpush1.bf16.msra.mxu0 %v1146
    %1202 = vmatprep.subr.bf16.mxu0 0
    %1203 = vmatpush1.bf16.msra.mxu0 %v1147
    %1204 = vmatprep.subr.bf16.mxu0 0
    %1205 = vmatpush1.bf16.msra.mxu0 %v1148
    %1206 = vmatprep.subr.bf16.mxu0 0
    %1207 = vmatpush1.bf16.msra.mxu0 %v1149
    %1208 = vmatprep.subr.bf16.mxu0 0
    %1209 = vmatpush1.bf16.msra.mxu0 %v1150
    %1210 = vmatprep.subr.bf16.mxu0 0
    %1211 = vmatpush1.bf16.msra.mxu0 %v1151
    %1212 = vmatprep.subr.bf16.mxu0 0
    %1213 = vmatpush1.bf16.msra.mxu0 %v1152
    %1214 = vmatprep.subr.bf16.mxu0 0
    %1215 = vmatpush1.bf16.msra.mxu0 %v1153
    %1216 = vmatprep.subr.bf16.mxu0 0
    %1217 = vmatpush1.bf16.msra.mxu0 %v1154
    %1218 = vmatprep.subr.bf16.mxu0 0
    %1219 = vmatpush1.bf16.msra.mxu0 %v1155
    %1220 = vmatprep.mubr.bf16.mxu0 %v987
    %1221 = vmatmul.mubr.bf16.gmra.mrb[0].mxu0 %v986
    %v1222 = vpop.f32.mrb[0].mxu0
    %v1223 = vadd.f32 %v1042, %v1222
    %v1224 = vpop.f32.mrb[0].mxu0
    %v1225 = vpop.f32.mrb[0].mxu0
    %v1226 = vadd.f32 %v1042, %v1225
    %v1227 = vpop.f32.mrb[0].mxu0
    %1228 = vdwg.mxu0
    %1229 = vmatprep.subr.bf16.mxu0 0
    %1230 = vmatpush1.bf16.msra.mxu0 %v1156
    %1231 = vmatprep.subr.bf16.mxu0 0
    %1232 = vmatpush1.bf16.msra.mxu0 %v1157
    %1233 = vmatprep.subr.bf16.mxu0 0
    %1234 = vmatpush1.bf16.msra.mxu0 %v1158
    %1235 = vmatprep.subr.bf16.mxu0 0
    %1236 = vmatpush1.bf16.msra.mxu0 %v1159
    %1237 = vmatprep.subr.bf16.mxu0 0
    %1238 = vmatpush1.bf16.msra.mxu0 %v1160
    %1239 = vmatprep.subr.bf16.mxu0 0
    %1240 = vmatpush1.bf16.msra.mxu0 %v1161
    %1241 = vmatprep.subr.bf16.mxu0 0
    %1242 = vmatpush1.bf16.msra.mxu0 %v1162
    %1243 = vmatprep.subr.bf16.mxu0 0
    %1244 = vmatpush1.bf16.msra.mxu0 %v1163
    %1245 = vmatprep.subr.bf16.mxu0 0
    %1246 = vmatpush1.bf16.msra.mxu0 0
    %1247 = vmatprep.subr.bf16.mxu0 0
    %1248 = vmatpush1.bf16.msra.mxu0 0
    %1249 = vmatprep.subr.bf16.mxu0 0
    %1250 = vmatpush1.bf16.msra.mxu0 0
    %1251 = vmatprep.subr.bf16.mxu0 0
    %1252 = vmatpush1.bf16.msra.mxu0 0
    %1253 = vmatprep.subr.bf16.mxu0 0
    %1254 = vmatpush1.bf16.msra.mxu0 0
    %1255 = vmatprep.subr.bf16.mxu0 0
    %1256 = vmatpush1.bf16.msra.mxu0 0
    %1257 = vmatprep.subr.bf16.mxu0 0
    %1258 = vmatpush1.bf16.msra.mxu0 0
    %1259 = vmatprep.subr.bf16.mxu0 0
    %1260 = vmatpush1.bf16.msra.mxu0 0
    %1261 = vmatprep.mubr.bf16.mxu0 0
    %1262 = vmatmul.mubr.bf16.gmra.mrb[0].mxu0 %v988
    %v1263 = vpop.f32.mrb[0].mxu0
    %v1264 = vadd.f32 %v1223, %v1263
    %v1265 = vpop.f32.mrb[0].mxu0
    %v1266 = vpop.f32.mrb[0].mxu0
    %v1267 = vadd.f32 %v1226, %v1266
    %v1268 = vpop.f32.mrb[0].mxu0
    %1269 = vdwg.mxu0
    %1270 = vst [vmem:[%s5] sm:$0xff] %v1264
    %1271 = vst [vmem:[%s5 + $0x8] sm:$0xff] %v1267
    // Predicated region
    $region30: #{associated_attention.1} parent=1 // pred_check
      _
    $region31: #{associated_attention.1} parent=1 // pred_check_branch
      %1273 = sbr.rel (0) target = $region33
    $region32: #{associated_attention.1} parent=1 // pred_region
      _
    $region33: #{associated_attention.1} parent=1 // pred_fallthru
      _
    // Predicated region
    $region34: #{associated_attention.1} parent=1 // pred_check
      _
    $region35: #{associated_attention.1} parent=1 // pred_check_branch
      %1275 = sbr.rel (0) target = $region37
    $region36: #{associated_attention.1} parent=1 // pred_region
      _
    $region37: #{associated_attention.1} parent=1 // pred_fallthru
      _
    %1276 = vsyncpa [#allocation4], 1
    %1277 = vsyncpa [#allocation6], 1

</llo_original>
